<compile_context>
chip_gen: v6e
topology: v6e:2x2x1
jax: 0.10.0
libtpu: 0.0.40
codegen_flags: <defaults>
</compile_context>

<pallas_src>
import jax
import jax.numpy as jnp
from jax import lax
from jax.experimental import pallas as pl
from jax.experimental.pallas import tpu as pltpu


def _round_up(x, m):
    return ((x + m - 1) // m) * m


def _vmem_limit_bytes():
    # Generation-aware VMEM budget: ~75% of physical (~96 MiB on v5e/v6e,
    # ~48 MiB per-TC on v7x).  Conservative 32 MiB fallback if the query fails.
    try:
        cap = getattr(pltpu.get_tpu_info(), "vmem_capacity_bytes", None)
        if cap:
            return int(cap) * 3 // 4
    except Exception:
        pass
    return 32 * 1024 * 1024


def neg_sampling_kernel(w_ref, b_ref, src_ref, tgt_ref, embt_ref, out_ref):
    """One pair-tile: vectorized one-hot MXU gather + MXU reduce + affine.

    w_ref, b_ref : (1, 1) f32 in SMEM        -- nn.Linear(1, 1) params
    src_ref      : (1, TILE) int32 in VMEM   -- source row ids for this tile
    tgt_ref      : (1, TILE) int32 in VMEM   -- target row ids for this tile
    embt_ref     : (d, n) f32 in VMEM        -- transposed embedding table (resident)
    out_ref      : (1, TILE) f32             -- w * <emb[src], emb[tgt]> + b
    """
    d, n = embt_ref.shape
    tile = src_ref.shape[1]

    src_ids = src_ref[...]                                        # (1, TILE) int32
    tgt_ids = tgt_ref[...]                                        # (1, TILE) int32

    # One-hot selection matrices on the VPU: onehot[j, i] = (ids[i] == j).
    # (An out-of-range id matches no row and yields a zero embedding -- there
    #  is no unchecked dynamic VMEM read in this formulation.)
    node_iota = lax.broadcasted_iota(jnp.int32, (n, tile), 0)
    onehot_src = (node_iota == src_ids).astype(jnp.float32)       # (n, TILE)
    onehot_tgt = (node_iota == tgt_ids).astype(jnp.float32)       # (n, TILE)

    # Gather on the MXU: column i of src_rows_t is emb[src[i], :].
    emb_t = embt_ref[...]                                         # (d, n)
    hi = jax.lax.Precision.HIGHEST                                # keep f32 numerics
    src_rows_t = jnp.dot(emb_t, onehot_src, precision=hi,
                         preferred_element_type=jnp.float32)      # (d, TILE)
    tgt_rows_t = jnp.dot(emb_t, onehot_tgt, precision=hi,
                         preferred_element_type=jnp.float32)      # (d, TILE)
    prod_t = src_rows_t * tgt_rows_t                              # (d, TILE)

    # Hidden-dim reduction on the MXU with the Linear weight folded into the
    # LHS: (8, d) @ (d, TILE) -> (8, TILE); all 8 rows identical, row 0 stored
    # as one unmasked lane-dense (1, TILE) write.
    lhs = jnp.full((8, d), w_ref[0, 0], dtype=jnp.float32)
    dots8 = jnp.dot(lhs, prod_t, precision=hi,
                    preferred_element_type=jnp.float32)           # (8, TILE)
    out_ref[...] = dots8[0:1, :] + b_ref[0, 0]


def negative_sampling_forward(embeddings, src_idx, tgt_idx, w, b, *, tile_pairs=2048):
    """embeddings: [num_nodes, hidden] f32; src_idx/tgt_idx: [num_pairs] int.

    Returns [num_pairs, 1] f32, matching the PyTorch module output.
    """
    embeddings = jnp.asarray(embeddings, jnp.float32)
    n, d = embeddings.shape
    p = int(src_idx.shape[0])

    # Lane-friendly pair tile (multiple of 128), clamped so small problems stay small.
    tile = min(_round_up(tile_pairs, 128), _round_up(p, 128))
    p_pad = _round_up(p, tile)
    num_tiles = p_pad // tile

    # Pad indices with 0 (a valid row); padded outputs are sliced away below.
    src_p = jnp.pad(src_idx.astype(jnp.int32), (0, p_pad - p)).reshape(num_tiles, tile)
    tgt_p = jnp.pad(tgt_idx.astype(jnp.int32), (0, p_pad - p)).reshape(num_tiles, tile)

    # Transposed table so the in-kernel gather needs no index/value transposes
    # (layout plumbing done once in the XLA wrapper, not per grid step).
    emb_t = embeddings.T                                          # (d, n)

    w2 = jnp.asarray(w, jnp.float32).reshape(1, 1)
    b2 = jnp.asarray(b, jnp.float32).reshape(1, 1)

    out_lane = pl.pallas_call(
        neg_sampling_kernel,
        out_shape=jax.ShapeDtypeStruct((num_tiles, tile), jnp.float32),
        grid_spec=pltpu.PrefetchScalarGridSpec(
            num_scalar_prefetch=0,
            grid=(num_tiles,),
            in_specs=[
                pl.BlockSpec(memory_space=pltpu.MemorySpace.SMEM),   # w scalar
                pl.BlockSpec(memory_space=pltpu.MemorySpace.SMEM),   # b scalar
                pl.BlockSpec((1, tile), lambda i: (i, 0)),           # src id tile
                pl.BlockSpec((1, tile), lambda i: (i, 0)),           # tgt id tile
                # Whole transposed table resident in VMEM: constant block index
                # across the grid -> DMA'd once, reused by every tile.
                # (For v7x-scale tables, consider pipeline_mode=pl.Buffered(1)
                #  on this spec to drop its second pipeline buffer.)
                pl.BlockSpec((d, n), lambda i: (0, 0)),
            ],
            out_specs=pl.BlockSpec((1, tile), lambda i: (i, 0)),
        ),
        compiler_params=pltpu.CompilerParams(
            dimension_semantics=("parallel",),     # shard pair tiles over v7x's 2 TCs
            vmem_limit_bytes=_vmem_limit_bytes(),
        ),
    )(w2, b2, src_p, tgt_p, emb_t)

    # Lane-dense (num_tiles, tile) -> PyTorch (P, 1) layout.
    return out_lane.reshape(-1)[:p].reshape(p, 1)


def reference_forward(embeddings, src_idx, tgt_idx, w, b):
    s = embeddings[src_idx, :]
    t = embeddings[tgt_idx, :]
    prod = (s * t).sum(axis=1)
    return prod.reshape(-1, 1) * w + b


if __name__ == "__main__":
    key = jax.random.PRNGKey(0)
    k_emb, k_src, k_tgt, k_w, k_b = jax.random.split(key, 5)

    # Small shapes consistent with the module: |{sources} U {targets}| deduped
    # nodes, hidden dim from graph_model, num_pairs NOT a tile multiple.
    num_nodes = 12
    hidden = 64
    num_pairs = 24

    # Deterministic stand-in for graph_model(as_node_seq, G) output.
    embeddings = jax.random.normal(k_emb, (num_nodes, hidden), dtype=jnp.float32)

    # source_indices / target_indices after the nodes_mapping remap.
    src_idx = jax.random.randint(k_src, (num_pairs,), 0, num_nodes, dtype=jnp.int32)
    tgt_idx = jax.random.randint(k_tgt, (num_pairs,), 0, num_nodes, dtype=jnp.int32)

    # nn.Linear(1, 1) parameters, deterministic.
    w = jax.random.normal(k_w, (), dtype=jnp.float32)
    b = jax.random.normal(k_b, (), dtype=jnp.float32)

    out = negative_sampling_forward(embeddings, src_idx, tgt_idx, w, b)
    out = jax.block_until_ready(out)
    ref = reference_forward(embeddings, src_idx, tgt_idx, w, b)
    assert out.shape == (num_pairs, 1)
    assert jnp.allclose(out, ref, atol=1e-4, rtol=1e-4)

    # Second check: multi-tile grid (num_tiles > 1) with a padded tail.
    k2 = jax.random.PRNGKey(1)
    k_emb2, k_src2, k_tgt2 = jax.random.split(k2, 3)
    num_nodes2, num_pairs2 = 40, 300
    embeddings2 = jax.random.normal(k_emb2, (num_nodes2, hidden), dtype=jnp.float32)
    src_idx2 = jax.random.randint(k_src2, (num_pairs2,), 0, num_nodes2, dtype=jnp.int32)
    tgt_idx2 = jax.random.randint(k_tgt2, (num_pairs2,), 0, num_nodes2, dtype=jnp.int32)
    out2 = negative_sampling_forward(embeddings2, src_idx2, tgt_idx2, w, b,
                                     tile_pairs=128)
    out2 = jax.block_until_ready(out2)
    ref2 = reference_forward(embeddings2, src_idx2, tgt_idx2, w, b)
    assert out2.shape == (num_pairs2, 1)
    assert jnp.allclose(out2, ref2, atol=1e-4, rtol=1e-4)

    print("KERNEL_OK")
</pallas_src>

<mosaic_0001>
module attributes {stable_mosaic.version = 11 : i64} {
  func.func @neg_sampling_kernel(%arg0: i32, %arg1: memref<1x1xf32, #tpu.memory_space<smem>>, %arg2: memref<1x1xf32, #tpu.memory_space<smem>>, %arg3: memref<1x128xi32, #tpu.memory_space<vmem>>, %arg4: memref<1x128xi32, #tpu.memory_space<vmem>>, %arg5: memref<64x12xf32, #tpu.memory_space<vmem>>, %arg6: memref<1x128xf32, #tpu.memory_space<vmem>>) attributes {dimension_semantics = [#tpu.dimension_semantics<parallel>], iteration_bounds = array<i64: 1>, scalar_prefetch = 0 : i64, scratch_operands = 0 : i64, tpu.core_type = #tpu.core_type<tc>, window_params = [{transform_indices = @transform_0, window_bounds = array<i64: 1, 1>}, {transform_indices = @transform_1, window_bounds = array<i64: 1, 1>}, {transform_indices = @transform_2, window_bounds = array<i64: 1, 128>}, {transform_indices = @transform_3, window_bounds = array<i64: 1, 128>}, {pipeline_mode = #tpu.pipeline_mode<synchronous>, transform_indices = @transform_4, window_bounds = array<i64: 64, 12>}, {transform_indices = @transform_5, window_bounds = array<i64: 1, 128>}]} {
    %c0 = arith.constant 0 : index
    %c0_0 = arith.constant 0 : index
    %0 = vector.load %arg3[%c0, %c0_0] : memref<1x128xi32, #tpu.memory_space<vmem>>, vector<1x128xi32>
    %c0_1 = arith.constant 0 : index
    %c0_2 = arith.constant 0 : index
    %1 = vector.load %arg4[%c0_1, %c0_2] : memref<1x128xi32, #tpu.memory_space<vmem>>, vector<1x128xi32>
    %2 = tpu.iota {dimensions = array<i32: 0>} : vector<12x128xi32>
    %3 = vector.broadcast %0 : vector<1x128xi32> to vector<12x128xi32>
    %4 = arith.cmpi eq, %2, %3 : vector<12x128xi32>
    %5 = arith.extui %4 : vector<12x128xi1> to vector<12x128xi32>
    %6 = arith.sitofp %5 : vector<12x128xi32> to vector<12x128xf32>
    %7 = vector.broadcast %1 : vector<1x128xi32> to vector<12x128xi32>
    %8 = arith.cmpi eq, %2, %7 : vector<12x128xi32>
    %9 = arith.extui %8 : vector<12x128xi1> to vector<12x128xi32>
    %10 = arith.sitofp %9 : vector<12x128xi32> to vector<12x128xf32>
    %c0_3 = arith.constant 0 : index
    %c0_4 = arith.constant 0 : index
    %11 = vector.load %arg5[%c0_3, %c0_4] : memref<64x12xf32, #tpu.memory_space<vmem>>, vector<64x12xf32>
    %cst = arith.constant dense<0.000000e+00> : vector<64x128xf32>
    %12 = tpu.matmul %11, %6, %cst {dimension_numbers = #tpu.dot_dimension_numbers<[1], [0], [0], [1], [0, 0, 1, 1], [], []>, precision = #tpu.contract_precision<fp32>} : vector<64x12xf32>, vector<12x128xf32>, vector<64x128xf32> -> vector<64x128xf32>
    %cst_5 = arith.constant dense<0.000000e+00> : vector<64x128xf32>
    %13 = tpu.matmul %11, %10, %cst_5 {dimension_numbers = #tpu.dot_dimension_numbers<[1], [0], [0], [1], [0, 0, 1, 1], [], []>, precision = #tpu.contract_precision<fp32>} : vector<64x12xf32>, vector<12x128xf32>, vector<64x128xf32> -> vector<64x128xf32>
    %14 = arith.mulf %12, %13 : vector<64x128xf32>
    %c0_6 = arith.constant 0 : index
    %c0_7 = arith.constant 0 : index
    %15 = memref.load %arg1[%c0_6, %c0_7] : memref<1x1xf32, #tpu.memory_space<smem>>
    %16 = vector.broadcast %15 : f32 to vector<8x64xf32>
    %cst_8 = arith.constant dense<0.000000e+00> : vector<8x128xf32>
    %17 = tpu.matmul %16, %14, %cst_8 {dimension_numbers = #tpu.dot_dimension_numbers<[1], [0], [0], [1], [0, 0, 1, 1], [], []>, precision = #tpu.contract_precision<fp32>} : vector<8x64xf32>, vector<64x128xf32>, vector<8x128xf32> -> vector<8x128xf32>
    %18 = vector.extract_strided_slice %17 {offsets = [0, 0], sizes = [1, 128], strides = [1, 1]} : vector<8x128xf32> to vector<1x128xf32>
    %c0_9 = arith.constant 0 : index
    %c0_10 = arith.constant 0 : index
    %19 = memref.load %arg2[%c0_9, %c0_10] : memref<1x1xf32, #tpu.memory_space<smem>>
    %20 = vector.broadcast %19 : f32 to vector<1x128xf32>
    %21 = arith.addf %18, %20 : vector<1x128xf32>
    %c0_11 = arith.constant 0 : index
    %c0_12 = arith.constant 0 : index
    %22 = vector.load %arg6[%c0_11, %c0_12] : memref<1x128xf32, #tpu.memory_space<vmem>>, vector<1x128xf32>
    tpu.vector_store %arg6[%c0_11, %c0_12], %21 {strides = array<i32>} : memref<1x128xf32, #tpu.memory_space<vmem>>, vector<1x128xf32>,
    return
  }
  func.func @transform_0(%arg0: i32) -> (i32, i32) {
    %c0_i32 = arith.constant 0 : i32
    %c0_i32_0 = arith.constant 0 : i32
    %c0_i32_1 = arith.constant 0 : i32
    return %c0_i32, %c0_i32_0 : i32, i32
  }
  func.func @transform_1(%arg0: i32) -> (i32, i32) {
    %c0_i32 = arith.constant 0 : i32
    %c0_i32_0 = arith.constant 0 : i32
    %c0_i32_1 = arith.constant 0 : i32
    return %c0_i32, %c0_i32_0 : i32, i32
  }
  func.func @transform_2(%arg0: i32) -> (i32, i32) {
    %c0_i32 = arith.constant 0 : i32
    %c0_i32_0 = arith.constant 0 : i32
    return %arg0, %c0_i32 : i32, i32
  }
  func.func @transform_3(%arg0: i32) -> (i32, i32) {
    %c0_i32 = arith.constant 0 : i32
    %c0_i32_0 = arith.constant 0 : i32
    return %arg0, %c0_i32 : i32, i32
  }
  func.func @transform_4(%arg0: i32) -> (i32, i32) {
    %c0_i32 = arith.constant 0 : i32
    %c0_i32_0 = arith.constant 0 : i32
    %c0_i32_1 = arith.constant 0 : i32
    return %c0_i32, %c0_i32_0 : i32, i32
  }
  func.func @transform_5(%arg0: i32) -> (i32, i32) {
    %c0_i32 = arith.constant 0 : i32
    %c0_i32_0 = arith.constant 0 : i32
    return %arg0, %c0_i32 : i32, i32
  }
}

</mosaic_0001>

<llo_original>
// kernel: tpu_custom_call.1
$region0: #{tpu_custom_call.1}
  #allocation0 [shape = 'u32[]', space=smem, size = 0x4, offset = 0x4, fixed_abs, tag = 'smem constant byte address 0x4 - core index']
  #allocation1 [shape = 'u32[144,128]{1,0:T(1,128)}', space=vmem, size = 0x12000, scoped, tag = 'internal scratch']
  #allocation2 [shape = 'f32[1,1]{1,0:T(1,128)S(6)}', space=smem, size = 0x200, scoped, tag = 'scoped memory for tpu_custom_call.1']
  #allocation3 [shape = 'f32[1,1]{1,0:T(1,128)S(6)}', space=smem, size = 0x200, scoped, tag = 'scoped memory for tpu_custom_call.1']
  %s0 = inlined_call_operand.<no memory space> [shape: f32[1,1], index: 0, kind: input, shape index: {}]
  %s1 = inlined_call_operand.<no memory space> [shape: f32[1,1], index: 1, kind: input, shape index: {}]
  %s2 = inlined_call_operand.vmem [shape: s32[1,128], index: 2, kind: input, shape index: {}]
  %s3 = inlined_call_operand.vmem [shape: s32[1,128], index: 3, kind: input, shape index: {}]
  %s4 = inlined_call_operand.vmem [shape: f32[64,12], index: 4, kind: input, shape index: {}]
  %s5 = inlined_call_operand.hbm [shape: f32[1,128], index: 5, kind: output, shape index: {}]
  %s6 = sld [smem:[#allocation0]]
  $region30: #{tpu_custom_call.1} parent=0
    _
  %s8 = ssub.s32 1, %s6
  %s9 = scalar_select 0, %s8, %s6
  %10 = sst [smem:[#allocation2]] %s0
  %11 = sst [smem:[#allocation3]] %s1
  $region1: #{tpu_custom_call.1} parent=0
    #allocation4 [shape = 'u8[512]{0}', space=vmem, size = 0x400, scoped, tag = 'output window, operand 0, single buffered']
    #allocation5 [shape = 's32[1]{0}', space=sflag, size = 0x4, scoped, tag = 'scoped memory for tpu_custom_call.1']
    %12 = vsyncpa [#allocation5], 0
    // Predicated region
    $region2: #{tpu_custom_call.1} parent=1 // pred_check
      _
    $region3: #{tpu_custom_call.1} parent=1 // pred_check_branch
      %14 = sbr.rel (0) target = $region5
    $region4: #{tpu_custom_call.1} parent=1 // pred_region
      _
    $region5: #{tpu_custom_call.1} parent=1 // pred_fallthru
      _
    // Predicated region
    $region6: #{tpu_custom_call.1} parent=1 // pred_check
      _
    $region7: #{tpu_custom_call.1} parent=1 // pred_check_branch
      %16 = sbr.rel (0) target = $region9
    $region8: #{tpu_custom_call.1} parent=1 // pred_region
      _
    $region9: #{tpu_custom_call.1} parent=1 // pred_fallthru
      _
    // Predicated region
    $region10: #{tpu_custom_call.1} parent=1 // pred_check
      _
    $region11: #{tpu_custom_call.1} parent=1 // pred_check_branch
      %18 = sbr.rel (0) target = $region13
    $region12: #{tpu_custom_call.1} parent=1 // pred_region
      _
    $region13: #{tpu_custom_call.1} parent=1 // pred_fallthru
      _
    // Predicated region
    $region14: #{tpu_custom_call.1} parent=1 // pred_check
      _
    $region15: #{tpu_custom_call.1} parent=1 // pred_check_branch
      %20 = sbr.rel (0) target = $region17
    $region16: #{tpu_custom_call.1} parent=1 // pred_region
      _
    $region17: #{tpu_custom_call.1} parent=1 // pred_fallthru
      _
    // Predicated region
    $region18: #{tpu_custom_call.1} parent=1 // pred_check
      _
    $region19: #{tpu_custom_call.1} parent=1 // pred_check_branch
      %22 = sbr.rel (0) target = $region21
    $region20: #{tpu_custom_call.1} parent=1 // pred_region
      _
    $region21: #{tpu_custom_call.1} parent=1 // pred_fallthru
      _
    %v23 = vld [vmem:[%s2] sm:$0x1]
    %v24 = vld [vmem:[%s3] sm:$0x1]
    %v25 = vlaneseq
    %v26 = vshrl.u32 %v25, 7
    %v27 = vadd.s32 %v26, 8
    %v28 = vlaneseq
    %v29 = vshrl.u32 %v28, 7
    %v30 = vsub.s32 0, %v29
    %v31 = vrot.slane %v23, %v30
    %vm32 = vcmp.eq.s32.totalorder %v26, %v31
    %vm33 = vcmp.eq.s32.totalorder %v27, %v31
    %v34 = vsel %vm32, 1, 0
    %v35 = vsel %vm33, 1, 0
    %v36 = vcvt.s32.f32 %v34
    %v37 = vcvt.s32.f32 %v35
    %v38 = vlaneseq
    %v39 = vshrl.u32 %v38, 7
    %v40 = vsub.s32 0, %v39
    %v41 = vrot.slane %v24, %v40
    %vm42 = vcmp.eq.s32.totalorder %v26, %v41
    %vm43 = vcmp.eq.s32.totalorder %v27, %v41
    %v44 = vsel %vm42, 1, 0
    %v45 = vsel %vm43, 1, 0
    %v46 = vcvt.s32.f32 %v44
    %v47 = vcvt.s32.f32 %v45
    %v48 = vld [vmem:[%s4] sm:$0xff]
    %v49 = vld [vmem:[%s4 + $0x8] sm:$0xff]
    %v50 = vld [vmem:[%s4 + $0x10] sm:$0xff]
    %v51 = vld [vmem:[%s4 + $0x18] sm:$0xff]
    %v52 = vld [vmem:[%s4 + $0x20] sm:$0xff]
    %v53 = vld [vmem:[%s4 + $0x28] sm:$0xff]
    %v54 = vld [vmem:[%s4 + $0x30] sm:$0xff]
    %v55 = vld [vmem:[%s4 + $0x38] sm:$0xff]
    %vm56 = vcmask 97280
    %v58 = vsel %vm56, %v48, 0
    %v61 = vsel %vm56, %v49, 0
    %v64 = vsel %vm56, %v50, 0
    %v67 = vsel %vm56, %v51, 0
    %v70 = vsel %vm56, %v52, 0
    %v73 = vsel %vm56, %v53, 0
    %v76 = vsel %vm56, %v54, 0
    %v79 = vsel %vm56, %v55, 0
    %vm81 = vcmask 1043456
    %v83 = vsel %vm81, %v37, 0
    %85 = vmatprep.subr.mxu0 0.0
    %86 = vmatpush1.msra.mxu0 0.0
    %87 = vmatprep.subr.mxu0 0.0
    %88 = vmatpush1.msra.mxu0 0.0
    %89 = vmatprep.subr.mxu0 0.0
    %90 = vmatpush1.msra.mxu0 0.0
    %91 = vmatprep.subr.mxu0 0.0
    %92 = vmatpush1.msra.mxu0 0.0
    %93 = vmatprep.subr.mxu0 0.0
    %94 = vmatpush1.msra.mxu0 0.0
    %95 = vmatprep.subr.mxu0 0.0
    %96 = vmatpush1.msra.mxu0 0.0
    %97 = vmatprep.subr.mxu0 0.0
    %98 = vmatpush1.msra.mxu0 0.0
    %99 = vmatprep.subr.mxu0 0.0
    %100 = vmatpush1.msra.mxu0 0.0
    %101 = vmatprep.subr.mxu0 0.0
    %102 = vmatpush1.msra.mxu0 0.0
    %103 = vmatprep.subr.mxu0 0.0
    %104 = vmatpush1.msra.mxu0 0.0
    %105 = vmatprep.subr.mxu0 0.0
    %106 = vmatpush1.msra.mxu0 0.0
    %107 = vmatprep.subr.mxu0 0.0
    %108 = vmatpush1.msra.mxu0 0.0
    %109 = vmatprep.subr.mxu0 0.0
    %110 = vmatpush1.msra.mxu0 0.0
    %111 = vmatprep.subr.mxu0 0.0
    %112 = vmatpush1.msra.mxu0 0.0
    %113 = vmatprep.subr.mxu0 0.0
    %v114 = vand.u32 %v83, 4294901760
    %115 = vmatpush1.msra.mxu0 %v114
    %116 = vmatprep.subr.mxu0 0.0
    %v117 = vand.u32 %v36, 4294901760
    %118 = vmatpush1.msra.mxu0 %v117
    %119 = vmatprep.subr.mxu0 0.0
    %120 = vmatpush2.msra.mxu0 0.0
    %121 = vmatprep.subr.mxu0 0.0
    %122 = vmatpush2.msra.mxu0 0.0
    %123 = vmatprep.subr.mxu0 0.0
    %124 = vmatpush2.msra.mxu0 0.0
    %125 = vmatprep.subr.mxu0 0.0
    %126 = vmatpush2.msra.mxu0 0.0
    %127 = vmatprep.subr.mxu0 0.0
    %128 = vmatpush2.msra.mxu0 0.0
    %129 = vmatprep.subr.mxu0 0.0
    %130 = vmatpush2.msra.mxu0 0.0
    %131 = vmatprep.subr.mxu0 0.0
    %132 = vmatpush2.msra.mxu0 0.0
    %133 = vmatprep.subr.mxu0 0.0
    %134 = vmatpush2.msra.mxu0 0.0
    %135 = vmatprep.subr.mxu0 0.0
    %136 = vmatpush2.msra.mxu0 0.0
    %137 = vmatprep.subr.mxu0 0.0
    %138 = vmatpush2.msra.mxu0 0.0
    %139 = vmatprep.subr.mxu0 0.0
    %140 = vmatpush2.msra.mxu0 0.0
    %141 = vmatprep.subr.mxu0 0.0
    %142 = vmatpush2.msra.mxu0 0.0
    %143 = vmatprep.subr.mxu0 0.0
    %144 = vmatpush2.msra.mxu0 0.0
    %145 = vmatprep.subr.mxu0 0.0
    %146 = vmatpush2.msra.mxu0 0.0
    %147 = vmatprep.subr.mxu0 0.0
    %148 = vmatpush2.msra.mxu0 0.0
    %149 = vmatprep.subr.mxu0 0.0
    %150 = vmatpush2.msra.mxu0 0.0
    %151 = vmatprep.mubr.f32.mxu0 0.0
    %v152 = vand.u32 %v58, 4294901760
    %v153 = vsub.f32 %v58, %v152
    %v154 = vand.u32 %v153, 4294901760
    %v155 = vsub.f32 %v153, %v154
    %v156 = vand.u32 %v155, 4294901760
    %157 = vmatmul.mubr.f32.gmra.mxu0 %v156
    %v158 = vpop.f32.mrf.mxu0
    %v159 = vadd.f32 0.0, %v158
    %v160 = vpop.f32.mrf.mxu0
    %161 = vmatprep.mubr.f32.mxu0 0.0
    %v162 = vand.u32 %v61, 4294901760
    %v163 = vsub.f32 %v61, %v162
    %v164 = vand.u32 %v163, 4294901760
    %v165 = vsub.f32 %v163, %v164
    %v166 = vand.u32 %v165, 4294901760
    %167 = vmatmul.mubr.f32.gmra.mxu0 %v166
    %v168 = vpop.f32.mrf.mxu0
    %v169 = vadd.f32 0.0, %v168
    %v170 = vpop.f32.mrf.mxu0
    %171 = vmatprep.mubr.f32.mxu0 0.0
    %v172 = vand.u32 %v64, 4294901760
    %v173 = vsub.f32 %v64, %v172
    %v174 = vand.u32 %v173, 4294901760
    %v175 = vsub.f32 %v173, %v174
    %v176 = vand.u32 %v175, 4294901760
    %177 = vmatmul.mubr.f32.gmra.mxu0 %v176
    %v178 = vpop.f32.mrf.mxu0
    %v179 = vadd.f32 0.0, %v178
    %v180 = vpop.f32.mrf.mxu0
    %181 = vmatprep.mubr.f32.mxu0 0.0
    %v182 = vand.u32 %v67, 4294901760
    %v183 = vsub.f32 %v67, %v182
    %v184 = vand.u32 %v183, 4294901760
    %v185 = vsub.f32 %v183, %v184
    %v186 = vand.u32 %v185, 4294901760
    %187 = vmatmul.mubr.f32.gmra.mxu0 %v186
    %v188 = vpop.f32.mrf.mxu0
    %v189 = vadd.f32 0.0, %v188
    %v190 = vpop.f32.mrf.mxu0
    %191 = vmatprep.mubr.f32.mxu0 0.0
    %v192 = vand.u32 %v70, 4294901760
    %v193 = vsub.f32 %v70, %v192
    %v194 = vand.u32 %v193, 4294901760
    %v195 = vsub.f32 %v193, %v194
    %v196 = vand.u32 %v195, 4294901760
    %197 = vmatmul.mubr.f32.gmra.mxu0 %v196
    %v198 = vpop.f32.mrf.mxu0
    %v199 = vadd.f32 0.0, %v198
    %v200 = vpop.f32.mrf.mxu0
    %201 = vmatprep.mubr.f32.mxu0 0.0
    %v202 = vand.u32 %v73, 4294901760
    %v203 = vsub.f32 %v73, %v202
    %v204 = vand.u32 %v203, 4294901760
    %v205 = vsub.f32 %v203, %v204
    %v206 = vand.u32 %v205, 4294901760
    %207 = vmatmul.mubr.f32.gmra.mxu0 %v206
    %v208 = vpop.f32.mrf.mxu0
    %v209 = vadd.f32 0.0, %v208
    %v210 = vpop.f32.mrf.mxu0
    %211 = vmatprep.mubr.f32.mxu0 0.0
    %v212 = vand.u32 %v76, 4294901760
    %v213 = vsub.f32 %v76, %v212
    %v214 = vand.u32 %v213, 4294901760
    %v215 = vsub.f32 %v213, %v214
    %v216 = vand.u32 %v215, 4294901760
    %217 = vmatmul.mubr.f32.gmra.mxu0 %v216
    %v218 = vpop.f32.mrf.mxu0
    %v219 = vadd.f32 0.0, %v218
    %v220 = vpop.f32.mrf.mxu0
    %221 = vmatprep.mubr.f32.mxu0 0.0
    %v222 = vand.u32 %v79, 4294901760
    %v223 = vsub.f32 %v79, %v222
    %v224 = vand.u32 %v223, 4294901760
    %v225 = vsub.f32 %v223, %v224
    %v226 = vand.u32 %v225, 4294901760
    %227 = vmatmul.mubr.f32.gmra.mxu0 %v226
    %v228 = vpop.f32.mrf.mxu0
    %v229 = vadd.f32 0.0, %v228
    %v230 = vpop.f32.mrf.mxu0
    %231 = vdwg.mxu0
    %232 = vmatprep.subr.mxu0 0.0
    %233 = vmatpush1.msra.mxu0 0.0
    %234 = vmatprep.subr.mxu0 0.0
    %235 = vmatpush1.msra.mxu0 0.0
    %236 = vmatprep.subr.mxu0 0.0
    %237 = vmatpush1.msra.mxu0 0.0
    %238 = vmatprep.subr.mxu0 0.0
    %239 = vmatpush1.msra.mxu0 0.0
    %240 = vmatprep.subr.mxu0 0.0
    %241 = vmatpush1.msra.mxu0 0.0
    %242 = vmatprep.subr.mxu0 0.0
    %243 = vmatpush1.msra.mxu0 0.0
    %244 = vmatprep.subr.mxu0 0.0
    %245 = vmatpush1.msra.mxu0 0.0
    %246 = vmatprep.subr.mxu0 0.0
    %247 = vmatpush1.msra.mxu0 0.0
    %248 = vmatprep.subr.mxu0 0.0
    %249 = vmatpush1.msra.mxu0 0.0
    %250 = vmatprep.subr.mxu0 0.0
    %251 = vmatpush1.msra.mxu0 0.0
    %252 = vmatprep.subr.mxu0 0.0
    %253 = vmatpush1.msra.mxu0 0.0
    %254 = vmatprep.subr.mxu0 0.0
    %255 = vmatpush1.msra.mxu0 0.0
    %256 = vmatprep.subr.mxu0 0.0
    %257 = vmatpush1.msra.mxu0 0.0
    %258 = vmatprep.subr.mxu0 0.0
    %259 = vmatpush1.msra.mxu0 0.0
    %260 = vmatprep.subr.mxu0 0.0
    %v261 = vand.u32 %v83, 4294901760
    %v262 = vsub.f32 %v83, %v261
    %v263 = vand.u32 %v262, 4294901760
    %v264 = vsub.f32 %v262, %v263
    %v265 = vand.u32 %v264, 4294901760
    %266 = vmatpush1.msra.mxu0 %v265
    %267 = vmatprep.subr.mxu0 0.0
    %v268 = vand.u32 %v36, 4294901760
    %v269 = vsub.f32 %v36, %v268
    %v270 = vand.u32 %v269, 4294901760
    %v271 = vsub.f32 %v269, %v270
    %v272 = vand.u32 %v271, 4294901760
    %273 = vmatpush1.msra.mxu0 %v272
    %274 = vmatprep.subr.mxu0 0.0
    %275 = vmatpush2.msra.mxu0 0.0
    %276 = vmatprep.subr.mxu0 0.0
    %277 = vmatpush2.msra.mxu0 0.0
    %278 = vmatprep.subr.mxu0 0.0
    %279 = vmatpush2.msra.mxu0 0.0
    %280 = vmatprep.subr.mxu0 0.0
    %281 = vmatpush2.msra.mxu0 0.0
    %282 = vmatprep.subr.mxu0 0.0
    %283 = vmatpush2.msra.mxu0 0.0
    %284 = vmatprep.subr.mxu0 0.0
    %285 = vmatpush2.msra.mxu0 0.0
    %286 = vmatprep.subr.mxu0 0.0
    %287 = vmatpush2.msra.mxu0 0.0
    %288 = vmatprep.subr.mxu0 0.0
    %289 = vmatpush2.msra.mxu0 0.0
    %290 = vmatprep.subr.mxu0 0.0
    %291 = vmatpush2.msra.mxu0 0.0
    %292 = vmatprep.subr.mxu0 0.0
    %293 = vmatpush2.msra.mxu0 0.0
    %294 = vmatprep.subr.mxu0 0.0
    %295 = vmatpush2.msra.mxu0 0.0
    %296 = vmatprep.subr.mxu0 0.0
    %297 = vmatpush2.msra.mxu0 0.0
    %298 = vmatprep.subr.mxu0 0.0
    %299 = vmatpush2.msra.mxu0 0.0
    %300 = vmatprep.subr.mxu0 0.0
    %301 = vmatpush2.msra.mxu0 0.0
    %302 = vmatprep.subr.mxu0 0.0
    %303 = vmatpush2.msra.mxu0 0.0
    %304 = vmatprep.subr.mxu0 0.0
    %305 = vmatpush2.msra.mxu0 0.0
    %306 = vmatprep.mubr.f32.mxu0 0.0
    %v307 = vand.u32 %v58, 4294901760
    %308 = vmatmul.mubr.f32.gmra.mxu0 %v307
    %v309 = vpop.f32.mrf.mxu0
    %v310 = vadd.f32 %v159, %v309
    %v311 = vpop.f32.mrf.mxu0
    %312 = vmatprep.mubr.f32.mxu0 0.0
    %v313 = vand.u32 %v61, 4294901760
    %314 = vmatmul.mubr.f32.gmra.mxu0 %v313
    %v315 = vpop.f32.mrf.mxu0
    %v316 = vadd.f32 %v169, %v315
    %v317 = vpop.f32.mrf.mxu0
    %318 = vmatprep.mubr.f32.mxu0 0.0
    %v319 = vand.u32 %v64, 4294901760
    %320 = vmatmul.mubr.f32.gmra.mxu0 %v319
    %v321 = vpop.f32.mrf.mxu0
    %v322 = vadd.f32 %v179, %v321
    %v323 = vpop.f32.mrf.mxu0
    %324 = vmatprep.mubr.f32.mxu0 0.0
    %v325 = vand.u32 %v67, 4294901760
    %326 = vmatmul.mubr.f32.gmra.mxu0 %v325
    %v327 = vpop.f32.mrf.mxu0
    %v328 = vadd.f32 %v189, %v327
    %v329 = vpop.f32.mrf.mxu0
    %330 = vmatprep.mubr.f32.mxu0 0.0
    %v331 = vand.u32 %v70, 4294901760
    %332 = vmatmul.mubr.f32.gmra.mxu0 %v331
    %v333 = vpop.f32.mrf.mxu0
    %v334 = vadd.f32 %v199, %v333
    %v335 = vpop.f32.mrf.mxu0
    %336 = vmatprep.mubr.f32.mxu0 0.0
    %v337 = vand.u32 %v73, 4294901760
    %338 = vmatmul.mubr.f32.gmra.mxu0 %v337
    %v339 = vpop.f32.mrf.mxu0
    %v340 = vadd.f32 %v209, %v339
    %v341 = vpop.f32.mrf.mxu0
    %342 = vmatprep.mubr.f32.mxu0 0.0
    %v343 = vand.u32 %v76, 4294901760
    %344 = vmatmul.mubr.f32.gmra.mxu0 %v343
    %v345 = vpop.f32.mrf.mxu0
    %v346 = vadd.f32 %v219, %v345
    %v347 = vpop.f32.mrf.mxu0
    %348 = vmatprep.mubr.f32.mxu0 0.0
    %v349 = vand.u32 %v79, 4294901760
    %350 = vmatmul.mubr.f32.gmra.mxu0 %v349
    %v351 = vpop.f32.mrf.mxu0
    %v352 = vadd.f32 %v229, %v351
    %v353 = vpop.f32.mrf.mxu0
    %354 = vdwg.mxu0
    %355 = vmatprep.subr.mxu0 0.0
    %356 = vmatpush1.msra.mxu0 0.0
    %357 = vmatprep.subr.mxu0 0.0
    %358 = vmatpush1.msra.mxu0 0.0
    %359 = vmatprep.subr.mxu0 0.0
    %360 = vmatpush1.msra.mxu0 0.0
    %361 = vmatprep.subr.mxu0 0.0
    %362 = vmatpush1.msra.mxu0 0.0
    %363 = vmatprep.subr.mxu0 0.0
    %364 = vmatpush1.msra.mxu0 0.0
    %365 = vmatprep.subr.mxu0 0.0
    %366 = vmatpush1.msra.mxu0 0.0
    %367 = vmatprep.subr.mxu0 0.0
    %368 = vmatpush1.msra.mxu0 0.0
    %369 = vmatprep.subr.mxu0 0.0
    %370 = vmatpush1.msra.mxu0 0.0
    %371 = vmatprep.subr.mxu0 0.0
    %372 = vmatpush1.msra.mxu0 0.0
    %373 = vmatprep.subr.mxu0 0.0
    %374 = vmatpush1.msra.mxu0 0.0
    %375 = vmatprep.subr.mxu0 0.0
    %376 = vmatpush1.msra.mxu0 0.0
    %377 = vmatprep.subr.mxu0 0.0
    %378 = vmatpush1.msra.mxu0 0.0
    %379 = vmatprep.subr.mxu0 0.0
    %380 = vmatpush1.msra.mxu0 0.0
    %381 = vmatprep.subr.mxu0 0.0
    %382 = vmatpush1.msra.mxu0 0.0
    %383 = vmatprep.subr.mxu0 0.0
    %v384 = vand.u32 %v83, 4294901760
    %v385 = vsub.f32 %v83, %v384
    %386 = vmatpush1.msra.mxu0 %v385
    %387 = vmatprep.subr.mxu0 0.0
    %v388 = vand.u32 %v36, 4294901760
    %v389 = vsub.f32 %v36, %v388
    %390 = vmatpush1.msra.mxu0 %v389
    %391 = vmatprep.subr.mxu0 0.0
    %392 = vmatpush2.msra.mxu0 0.0
    %393 = vmatprep.subr.mxu0 0.0
    %394 = vmatpush2.msra.mxu0 0.0
    %395 = vmatprep.subr.mxu0 0.0
    %396 = vmatpush2.msra.mxu0 0.0
    %397 = vmatprep.subr.mxu0 0.0
    %398 = vmatpush2.msra.mxu0 0.0
    %399 = vmatprep.subr.mxu0 0.0
    %400 = vmatpush2.msra.mxu0 0.0
    %401 = vmatprep.subr.mxu0 0.0
    %402 = vmatpush2.msra.mxu0 0.0
    %403 = vmatprep.subr.mxu0 0.0
    %404 = vmatpush2.msra.mxu0 0.0
    %405 = vmatprep.subr.mxu0 0.0
    %406 = vmatpush2.msra.mxu0 0.0
    %407 = vmatprep.subr.mxu0 0.0
    %408 = vmatpush2.msra.mxu0 0.0
    %409 = vmatprep.subr.mxu0 0.0
    %410 = vmatpush2.msra.mxu0 0.0
    %411 = vmatprep.subr.mxu0 0.0
    %412 = vmatpush2.msra.mxu0 0.0
    %413 = vmatprep.subr.mxu0 0.0
    %414 = vmatpush2.msra.mxu0 0.0
    %415 = vmatprep.subr.mxu0 0.0
    %416 = vmatpush2.msra.mxu0 0.0
    %417 = vmatprep.subr.mxu0 0.0
    %418 = vmatpush2.msra.mxu0 0.0
    %419 = vmatprep.subr.mxu0 0.0
    %420 = vmatpush2.msra.mxu0 0.0
    %421 = vmatprep.subr.mxu0 0.0
    %422 = vmatpush2.msra.mxu0 0.0
    %423 = vmatprep.mubr.f32.mxu0 0.0
    %v424 = vand.u32 %v58, 4294901760
    %v425 = vsub.f32 %v58, %v424
    %426 = vmatmul.mubr.f32.gmra.mxu0 %v425
    %v427 = vpop.f32.mrf.mxu0
    %v428 = vadd.f32 %v310, %v427
    %v429 = vpop.f32.mrf.mxu0
    %430 = vmatprep.mubr.f32.mxu0 0.0
    %v431 = vand.u32 %v61, 4294901760
    %v432 = vsub.f32 %v61, %v431
    %433 = vmatmul.mubr.f32.gmra.mxu0 %v432
    %v434 = vpop.f32.mrf.mxu0
    %v435 = vadd.f32 %v316, %v434
    %v436 = vpop.f32.mrf.mxu0
    %437 = vmatprep.mubr.f32.mxu0 0.0
    %v438 = vand.u32 %v64, 4294901760
    %v439 = vsub.f32 %v64, %v438
    %440 = vmatmul.mubr.f32.gmra.mxu0 %v439
    %v441 = vpop.f32.mrf.mxu0
    %v442 = vadd.f32 %v322, %v441
    %v443 = vpop.f32.mrf.mxu0
    %444 = vmatprep.mubr.f32.mxu0 0.0
    %v445 = vand.u32 %v67, 4294901760
    %v446 = vsub.f32 %v67, %v445
    %447 = vmatmul.mubr.f32.gmra.mxu0 %v446
    %v448 = vpop.f32.mrf.mxu0
    %v449 = vadd.f32 %v328, %v448
    %v450 = vpop.f32.mrf.mxu0
    %451 = vmatprep.mubr.f32.mxu0 0.0
    %v452 = vand.u32 %v70, 4294901760
    %v453 = vsub.f32 %v70, %v452
    %454 = vmatmul.mubr.f32.gmra.mxu0 %v453
    %v455 = vpop.f32.mrf.mxu0
    %v456 = vadd.f32 %v334, %v455
    %v457 = vpop.f32.mrf.mxu0
    %458 = vmatprep.mubr.f32.mxu0 0.0
    %v459 = vand.u32 %v73, 4294901760
    %v460 = vsub.f32 %v73, %v459
    %461 = vmatmul.mubr.f32.gmra.mxu0 %v460
    %v462 = vpop.f32.mrf.mxu0
    %v463 = vadd.f32 %v340, %v462
    %v464 = vpop.f32.mrf.mxu0
    %465 = vmatprep.mubr.f32.mxu0 0.0
    %v466 = vand.u32 %v76, 4294901760
    %v467 = vsub.f32 %v76, %v466
    %468 = vmatmul.mubr.f32.gmra.mxu0 %v467
    %v469 = vpop.f32.mrf.mxu0
    %v470 = vadd.f32 %v346, %v469
    %v471 = vpop.f32.mrf.mxu0
    %472 = vmatprep.mubr.f32.mxu0 0.0
    %v473 = vand.u32 %v79, 4294901760
    %v474 = vsub.f32 %v79, %v473
    %475 = vmatmul.mubr.f32.gmra.mxu0 %v474
    %v476 = vpop.f32.mrf.mxu0
    %v477 = vadd.f32 %v352, %v476
    %v478 = vpop.f32.mrf.mxu0
    %479 = vdwg.mxu0
    %480 = vmatprep.subr.mxu0 0.0
    %481 = vmatpush1.msra.mxu0 0.0
    %482 = vmatprep.subr.mxu0 0.0
    %483 = vmatpush1.msra.mxu0 0.0
    %484 = vmatprep.subr.mxu0 0.0
    %485 = vmatpush1.msra.mxu0 0.0
    %486 = vmatprep.subr.mxu0 0.0
    %487 = vmatpush1.msra.mxu0 0.0
    %488 = vmatprep.subr.mxu0 0.0
    %489 = vmatpush1.msra.mxu0 0.0
    %490 = vmatprep.subr.mxu0 0.0
    %491 = vmatpush1.msra.mxu0 0.0
    %492 = vmatprep.subr.mxu0 0.0
    %493 = vmatpush1.msra.mxu0 0.0
    %494 = vmatprep.subr.mxu0 0.0
    %495 = vmatpush1.msra.mxu0 0.0
    %496 = vmatprep.subr.mxu0 0.0
    %497 = vmatpush1.msra.mxu0 0.0
    %498 = vmatprep.subr.mxu0 0.0
    %499 = vmatpush1.msra.mxu0 0.0
    %500 = vmatprep.subr.mxu0 0.0
    %501 = vmatpush1.msra.mxu0 0.0
    %502 = vmatprep.subr.mxu0 0.0
    %503 = vmatpush1.msra.mxu0 0.0
    %504 = vmatprep.subr.mxu0 0.0
    %505 = vmatpush1.msra.mxu0 0.0
    %506 = vmatprep.subr.mxu0 0.0
    %507 = vmatpush1.msra.mxu0 0.0
    %508 = vmatprep.subr.mxu0 0.0
    %v509 = vand.u32 %v83, 4294901760
    %510 = vmatpush1.msra.mxu0 %v509
    %511 = vmatprep.subr.mxu0 0.0
    %v512 = vand.u32 %v36, 4294901760
    %513 = vmatpush1.msra.mxu0 %v512
    %514 = vmatprep.subr.mxu0 0.0
    %515 = vmatpush2.msra.mxu0 0.0
    %516 = vmatprep.subr.mxu0 0.0
    %517 = vmatpush2.msra.mxu0 0.0
    %518 = vmatprep.subr.mxu0 0.0
    %519 = vmatpush2.msra.mxu0 0.0
    %520 = vmatprep.subr.mxu0 0.0
    %521 = vmatpush2.msra.mxu0 0.0
    %522 = vmatprep.subr.mxu0 0.0
    %523 = vmatpush2.msra.mxu0 0.0
    %524 = vmatprep.subr.mxu0 0.0
    %525 = vmatpush2.msra.mxu0 0.0
    %526 = vmatprep.subr.mxu0 0.0
    %527 = vmatpush2.msra.mxu0 0.0
    %528 = vmatprep.subr.mxu0 0.0
    %529 = vmatpush2.msra.mxu0 0.0
    %530 = vmatprep.subr.mxu0 0.0
    %531 = vmatpush2.msra.mxu0 0.0
    %532 = vmatprep.subr.mxu0 0.0
    %533 = vmatpush2.msra.mxu0 0.0
    %534 = vmatprep.subr.mxu0 0.0
    %535 = vmatpush2.msra.mxu0 0.0
    %536 = vmatprep.subr.mxu0 0.0
    %537 = vmatpush2.msra.mxu0 0.0
    %538 = vmatprep.subr.mxu0 0.0
    %539 = vmatpush2.msra.mxu0 0.0
    %540 = vmatprep.subr.mxu0 0.0
    %541 = vmatpush2.msra.mxu0 0.0
    %542 = vmatprep.subr.mxu0 0.0
    %543 = vmatpush2.msra.mxu0 0.0
    %544 = vmatprep.subr.mxu0 0.0
    %545 = vmatpush2.msra.mxu0 0.0
    %546 = vmatprep.mubr.f32.mxu0 0.0
    %v547 = vand.u32 %v58, 4294901760
    %v548 = vsub.f32 %v58, %v547
    %v549 = vand.u32 %v548, 4294901760
    %550 = vmatmul.mubr.f32.gmra.mxu0 %v549
    %v551 = vpop.f32.mrf.mxu0
    %v552 = vadd.f32 %v428, %v551
    %v553 = vpop.f32.mrf.mxu0
    %554 = vmatprep.mubr.f32.mxu0 0.0
    %v555 = vand.u32 %v61, 4294901760
    %v556 = vsub.f32 %v61, %v555
    %v557 = vand.u32 %v556, 4294901760
    %558 = vmatmul.mubr.f32.gmra.mxu0 %v557
    %v559 = vpop.f32.mrf.mxu0
    %v560 = vadd.f32 %v435, %v559
    %v561 = vpop.f32.mrf.mxu0
    %562 = vmatprep.mubr.f32.mxu0 0.0
    %v563 = vand.u32 %v64, 4294901760
    %v564 = vsub.f32 %v64, %v563
    %v565 = vand.u32 %v564, 4294901760
    %566 = vmatmul.mubr.f32.gmra.mxu0 %v565
    %v567 = vpop.f32.mrf.mxu0
    %v568 = vadd.f32 %v442, %v567
    %v569 = vpop.f32.mrf.mxu0
    %570 = vmatprep.mubr.f32.mxu0 0.0
    %v571 = vand.u32 %v67, 4294901760
    %v572 = vsub.f32 %v67, %v571
    %v573 = vand.u32 %v572, 4294901760
    %574 = vmatmul.mubr.f32.gmra.mxu0 %v573
    %v575 = vpop.f32.mrf.mxu0
    %v576 = vadd.f32 %v449, %v575
    %v577 = vpop.f32.mrf.mxu0
    %578 = vmatprep.mubr.f32.mxu0 0.0
    %v579 = vand.u32 %v70, 4294901760
    %v580 = vsub.f32 %v70, %v579
    %v581 = vand.u32 %v580, 4294901760
    %582 = vmatmul.mubr.f32.gmra.mxu0 %v581
    %v583 = vpop.f32.mrf.mxu0
    %v584 = vadd.f32 %v456, %v583
    %v585 = vpop.f32.mrf.mxu0
    %586 = vmatprep.mubr.f32.mxu0 0.0
    %v587 = vand.u32 %v73, 4294901760
    %v588 = vsub.f32 %v73, %v587
    %v589 = vand.u32 %v588, 4294901760
    %590 = vmatmul.mubr.f32.gmra.mxu0 %v589
    %v591 = vpop.f32.mrf.mxu0
    %v592 = vadd.f32 %v463, %v591
    %v593 = vpop.f32.mrf.mxu0
    %594 = vmatprep.mubr.f32.mxu0 0.0
    %v595 = vand.u32 %v76, 4294901760
    %v596 = vsub.f32 %v76, %v595
    %v597 = vand.u32 %v596, 4294901760
    %598 = vmatmul.mubr.f32.gmra.mxu0 %v597
    %v599 = vpop.f32.mrf.mxu0
    %v600 = vadd.f32 %v470, %v599
    %v601 = vpop.f32.mrf.mxu0
    %602 = vmatprep.mubr.f32.mxu0 0.0
    %v603 = vand.u32 %v79, 4294901760
    %v604 = vsub.f32 %v79, %v603
    %v605 = vand.u32 %v604, 4294901760
    %606 = vmatmul.mubr.f32.gmra.mxu0 %v605
    %v607 = vpop.f32.mrf.mxu0
    %v608 = vadd.f32 %v477, %v607
    %v609 = vpop.f32.mrf.mxu0
    %610 = vdwg.mxu0
    %611 = vmatprep.subr.mxu0 0.0
    %612 = vmatpush1.msra.mxu0 0.0
    %613 = vmatprep.subr.mxu0 0.0
    %614 = vmatpush1.msra.mxu0 0.0
    %615 = vmatprep.subr.mxu0 0.0
    %616 = vmatpush1.msra.mxu0 0.0
    %617 = vmatprep.subr.mxu0 0.0
    %618 = vmatpush1.msra.mxu0 0.0
    %619 = vmatprep.subr.mxu0 0.0
    %620 = vmatpush1.msra.mxu0 0.0
    %621 = vmatprep.subr.mxu0 0.0
    %622 = vmatpush1.msra.mxu0 0.0
    %623 = vmatprep.subr.mxu0 0.0
    %624 = vmatpush1.msra.mxu0 0.0
    %625 = vmatprep.subr.mxu0 0.0
    %626 = vmatpush1.msra.mxu0 0.0
    %627 = vmatprep.subr.mxu0 0.0
    %628 = vmatpush1.msra.mxu0 0.0
    %629 = vmatprep.subr.mxu0 0.0
    %630 = vmatpush1.msra.mxu0 0.0
    %631 = vmatprep.subr.mxu0 0.0
    %632 = vmatpush1.msra.mxu0 0.0
    %633 = vmatprep.subr.mxu0 0.0
    %634 = vmatpush1.msra.mxu0 0.0
    %635 = vmatprep.subr.mxu0 0.0
    %636 = vmatpush1.msra.mxu0 0.0
    %637 = vmatprep.subr.mxu0 0.0
    %638 = vmatpush1.msra.mxu0 0.0
    %639 = vmatprep.subr.mxu0 0.0
    %v640 = vand.u32 %v83, 4294901760
    %v641 = vsub.f32 %v83, %v640
    %v642 = vand.u32 %v641, 4294901760
    %643 = vmatpush1.msra.mxu0 %v642
    %644 = vmatprep.subr.mxu0 0.0
    %v645 = vand.u32 %v36, 4294901760
    %v646 = vsub.f32 %v36, %v645
    %v647 = vand.u32 %v646, 4294901760
    %648 = vmatpush1.msra.mxu0 %v647
    %649 = vmatprep.subr.mxu0 0.0
    %650 = vmatpush2.msra.mxu0 0.0
    %651 = vmatprep.subr.mxu0 0.0
    %652 = vmatpush2.msra.mxu0 0.0
    %653 = vmatprep.subr.mxu0 0.0
    %654 = vmatpush2.msra.mxu0 0.0
    %655 = vmatprep.subr.mxu0 0.0
    %656 = vmatpush2.msra.mxu0 0.0
    %657 = vmatprep.subr.mxu0 0.0
    %658 = vmatpush2.msra.mxu0 0.0
    %659 = vmatprep.subr.mxu0 0.0
    %660 = vmatpush2.msra.mxu0 0.0
    %661 = vmatprep.subr.mxu0 0.0
    %662 = vmatpush2.msra.mxu0 0.0
    %663 = vmatprep.subr.mxu0 0.0
    %664 = vmatpush2.msra.mxu0 0.0
    %665 = vmatprep.subr.mxu0 0.0
    %666 = vmatpush2.msra.mxu0 0.0
    %667 = vmatprep.subr.mxu0 0.0
    %668 = vmatpush2.msra.mxu0 0.0
    %669 = vmatprep.subr.mxu0 0.0
    %670 = vmatpush2.msra.mxu0 0.0
    %671 = vmatprep.subr.mxu0 0.0
    %672 = vmatpush2.msra.mxu0 0.0
    %673 = vmatprep.subr.mxu0 0.0
    %674 = vmatpush2.msra.mxu0 0.0
    %675 = vmatprep.subr.mxu0 0.0
    %676 = vmatpush2.msra.mxu0 0.0
    %677 = vmatprep.subr.mxu0 0.0
    %678 = vmatpush2.msra.mxu0 0.0
    %679 = vmatprep.subr.mxu0 0.0
    %680 = vmatpush2.msra.mxu0 0.0
    %681 = vmatprep.mubr.f32.mxu0 0.0
    %v682 = vand.u32 %v58, 4294901760
    %683 = vmatmul.mubr.f32.gmra.mxu0 %v682
    %v684 = vpop.f32.mrf.mxu0
    %v685 = vadd.f32 %v552, %v684
    %v686 = vpop.f32.mrf.mxu0
    %687 = vmatprep.mubr.f32.mxu0 0.0
    %v688 = vand.u32 %v61, 4294901760
    %689 = vmatmul.mubr.f32.gmra.mxu0 %v688
    %v690 = vpop.f32.mrf.mxu0
    %v691 = vadd.f32 %v560, %v690
    %v692 = vpop.f32.mrf.mxu0
    %693 = vmatprep.mubr.f32.mxu0 0.0
    %v694 = vand.u32 %v64, 4294901760
    %695 = vmatmul.mubr.f32.gmra.mxu0 %v694
    %v696 = vpop.f32.mrf.mxu0
    %v697 = vadd.f32 %v568, %v696
    %v698 = vpop.f32.mrf.mxu0
    %699 = vmatprep.mubr.f32.mxu0 0.0
    %v700 = vand.u32 %v67, 4294901760
    %701 = vmatmul.mubr.f32.gmra.mxu0 %v700
    %v702 = vpop.f32.mrf.mxu0
    %v703 = vadd.f32 %v576, %v702
    %v704 = vpop.f32.mrf.mxu0
    %705 = vmatprep.mubr.f32.mxu0 0.0
    %v706 = vand.u32 %v70, 4294901760
    %707 = vmatmul.mubr.f32.gmra.mxu0 %v706
    %v708 = vpop.f32.mrf.mxu0
    %v709 = vadd.f32 %v584, %v708
    %v710 = vpop.f32.mrf.mxu0
    %711 = vmatprep.mubr.f32.mxu0 0.0
    %v712 = vand.u32 %v73, 4294901760
    %713 = vmatmul.mubr.f32.gmra.mxu0 %v712
    %v714 = vpop.f32.mrf.mxu0
    %v715 = vadd.f32 %v592, %v714
    %v716 = vpop.f32.mrf.mxu0
    %717 = vmatprep.mubr.f32.mxu0 0.0
    %v718 = vand.u32 %v76, 4294901760
    %719 = vmatmul.mubr.f32.gmra.mxu0 %v718
    %v720 = vpop.f32.mrf.mxu0
    %v721 = vadd.f32 %v600, %v720
    %v722 = vpop.f32.mrf.mxu0
    %723 = vmatprep.mubr.f32.mxu0 0.0
    %v724 = vand.u32 %v79, 4294901760
    %725 = vmatmul.mubr.f32.gmra.mxu0 %v724
    %v726 = vpop.f32.mrf.mxu0
    %v727 = vadd.f32 %v608, %v726
    %v728 = vpop.f32.mrf.mxu0
    %729 = vdwg.mxu0
    %730 = vmatprep.subr.mxu0 0.0
    %731 = vmatpush1.msra.mxu0 0.0
    %732 = vmatprep.subr.mxu0 0.0
    %733 = vmatpush1.msra.mxu0 0.0
    %734 = vmatprep.subr.mxu0 0.0
    %735 = vmatpush1.msra.mxu0 0.0
    %736 = vmatprep.subr.mxu0 0.0
    %737 = vmatpush1.msra.mxu0 0.0
    %738 = vmatprep.subr.mxu0 0.0
    %739 = vmatpush1.msra.mxu0 0.0
    %740 = vmatprep.subr.mxu0 0.0
    %741 = vmatpush1.msra.mxu0 0.0
    %742 = vmatprep.subr.mxu0 0.0
    %743 = vmatpush1.msra.mxu0 0.0
    %744 = vmatprep.subr.mxu0 0.0
    %745 = vmatpush1.msra.mxu0 0.0
    %746 = vmatprep.subr.mxu0 0.0
    %747 = vmatpush1.msra.mxu0 0.0
    %748 = vmatprep.subr.mxu0 0.0
    %749 = vmatpush1.msra.mxu0 0.0
    %750 = vmatprep.subr.mxu0 0.0
    %751 = vmatpush1.msra.mxu0 0.0
    %752 = vmatprep.subr.mxu0 0.0
    %753 = vmatpush1.msra.mxu0 0.0
    %754 = vmatprep.subr.mxu0 0.0
    %755 = vmatpush1.msra.mxu0 0.0
    %756 = vmatprep.subr.mxu0 0.0
    %757 = vmatpush1.msra.mxu0 0.0
    %758 = vmatprep.subr.mxu0 0.0
    %v759 = vand.u32 %v83, 4294901760
    %760 = vmatpush1.msra.mxu0 %v759
    %761 = vmatprep.subr.mxu0 0.0
    %v762 = vand.u32 %v36, 4294901760
    %763 = vmatpush1.msra.mxu0 %v762
    %764 = vmatprep.subr.mxu0 0.0
    %765 = vmatpush2.msra.mxu0 0.0
    %766 = vmatprep.subr.mxu0 0.0
    %767 = vmatpush2.msra.mxu0 0.0
    %768 = vmatprep.subr.mxu0 0.0
    %769 = vmatpush2.msra.mxu0 0.0
    %770 = vmatprep.subr.mxu0 0.0
    %771 = vmatpush2.msra.mxu0 0.0
    %772 = vmatprep.subr.mxu0 0.0
    %773 = vmatpush2.msra.mxu0 0.0
    %774 = vmatprep.subr.mxu0 0.0
    %775 = vmatpush2.msra.mxu0 0.0
    %776 = vmatprep.subr.mxu0 0.0
    %777 = vmatpush2.msra.mxu0 0.0
    %778 = vmatprep.subr.mxu0 0.0
    %779 = vmatpush2.msra.mxu0 0.0
    %780 = vmatprep.subr.mxu0 0.0
    %781 = vmatpush2.msra.mxu0 0.0
    %782 = vmatprep.subr.mxu0 0.0
    %783 = vmatpush2.msra.mxu0 0.0
    %784 = vmatprep.subr.mxu0 0.0
    %785 = vmatpush2.msra.mxu0 0.0
    %786 = vmatprep.subr.mxu0 0.0
    %787 = vmatpush2.msra.mxu0 0.0
    %788 = vmatprep.subr.mxu0 0.0
    %789 = vmatpush2.msra.mxu0 0.0
    %790 = vmatprep.subr.mxu0 0.0
    %791 = vmatpush2.msra.mxu0 0.0
    %792 = vmatprep.subr.mxu0 0.0
    %793 = vmatpush2.msra.mxu0 0.0
    %794 = vmatprep.subr.mxu0 0.0
    %795 = vmatpush2.msra.mxu0 0.0
    %796 = vmatprep.mubr.f32.mxu0 0.0
    %v797 = vand.u32 %v58, 4294901760
    %798 = vmatmul.mubr.f32.gmra.mxu0 %v797
    %v799 = vpop.f32.mrf.mxu0
    %v800 = vadd.f32 %v685, %v799
    %v801 = vpop.f32.mrf.mxu0
    %802 = vmatprep.mubr.f32.mxu0 0.0
    %v803 = vand.u32 %v61, 4294901760
    %804 = vmatmul.mubr.f32.gmra.mxu0 %v803
    %v805 = vpop.f32.mrf.mxu0
    %v806 = vadd.f32 %v691, %v805
    %v807 = vpop.f32.mrf.mxu0
    %808 = vmatprep.mubr.f32.mxu0 0.0
    %v809 = vand.u32 %v64, 4294901760
    %810 = vmatmul.mubr.f32.gmra.mxu0 %v809
    %v811 = vpop.f32.mrf.mxu0
    %v812 = vadd.f32 %v697, %v811
    %v813 = vpop.f32.mrf.mxu0
    %814 = vmatprep.mubr.f32.mxu0 0.0
    %v815 = vand.u32 %v67, 4294901760
    %816 = vmatmul.mubr.f32.gmra.mxu0 %v815
    %v817 = vpop.f32.mrf.mxu0
    %v818 = vadd.f32 %v703, %v817
    %v819 = vpop.f32.mrf.mxu0
    %820 = vmatprep.mubr.f32.mxu0 0.0
    %v821 = vand.u32 %v70, 4294901760
    %822 = vmatmul.mubr.f32.gmra.mxu0 %v821
    %v823 = vpop.f32.mrf.mxu0
    %v824 = vadd.f32 %v709, %v823
    %v825 = vpop.f32.mrf.mxu0
    %826 = vmatprep.mubr.f32.mxu0 0.0
    %v827 = vand.u32 %v73, 4294901760
    %828 = vmatmul.mubr.f32.gmra.mxu0 %v827
    %v829 = vpop.f32.mrf.mxu0
    %v830 = vadd.f32 %v715, %v829
    %v831 = vpop.f32.mrf.mxu0
    %832 = vmatprep.mubr.f32.mxu0 0.0
    %v833 = vand.u32 %v76, 4294901760
    %834 = vmatmul.mubr.f32.gmra.mxu0 %v833
    %v835 = vpop.f32.mrf.mxu0
    %v836 = vadd.f32 %v721, %v835
    %v837 = vpop.f32.mrf.mxu0
    %838 = vmatprep.mubr.f32.mxu0 0.0
    %v839 = vand.u32 %v79, 4294901760
    %840 = vmatmul.mubr.f32.gmra.mxu0 %v839
    %v841 = vpop.f32.mrf.mxu0
    %v842 = vadd.f32 %v727, %v841
    %v843 = vpop.f32.mrf.mxu0
    %844 = vdwg.mxu0
    %v846 = vsel %vm81, %v47, 0
    %848 = vmatprep.subr.mxu0 0.0
    %849 = vmatpush1.msra.mxu0 0.0
    %850 = vmatprep.subr.mxu0 0.0
    %851 = vmatpush1.msra.mxu0 0.0
    %852 = vmatprep.subr.mxu0 0.0
    %853 = vmatpush1.msra.mxu0 0.0
    %854 = vmatprep.subr.mxu0 0.0
    %855 = vmatpush1.msra.mxu0 0.0
    %856 = vmatprep.subr.mxu0 0.0
    %857 = vmatpush1.msra.mxu0 0.0
    %858 = vmatprep.subr.mxu0 0.0
    %859 = vmatpush1.msra.mxu0 0.0
    %860 = vmatprep.subr.mxu0 0.0
    %861 = vmatpush1.msra.mxu0 0.0
    %862 = vmatprep.subr.mxu0 0.0
    %863 = vmatpush1.msra.mxu0 0.0
    %864 = vmatprep.subr.mxu0 0.0
    %865 = vmatpush1.msra.mxu0 0.0
    %866 = vmatprep.subr.mxu0 0.0
    %867 = vmatpush1.msra.mxu0 0.0
    %868 = vmatprep.subr.mxu0 0.0
    %869 = vmatpush1.msra.mxu0 0.0
    %870 = vmatprep.subr.mxu0 0.0
    %871 = vmatpush1.msra.mxu0 0.0
    %872 = vmatprep.subr.mxu0 0.0
    %873 = vmatpush1.msra.mxu0 0.0
    %874 = vmatprep.subr.mxu0 0.0
    %875 = vmatpush1.msra.mxu0 0.0
    %876 = vmatprep.subr.mxu0 0.0
    %v877 = vand.u32 %v846, 4294901760
    %878 = vmatpush1.msra.mxu0 %v877
    %879 = vmatprep.subr.mxu0 0.0
    %v880 = vand.u32 %v46, 4294901760
    %881 = vmatpush1.msra.mxu0 %v880
    %882 = vmatprep.subr.mxu0 0.0
    %883 = vmatpush2.msra.mxu0 0.0
    %884 = vmatprep.subr.mxu0 0.0
    %885 = vmatpush2.msra.mxu0 0.0
    %886 = vmatprep.subr.mxu0 0.0
    %887 = vmatpush2.msra.mxu0 0.0
    %888 = vmatprep.subr.mxu0 0.0
    %889 = vmatpush2.msra.mxu0 0.0
    %890 = vmatprep.subr.mxu0 0.0
    %891 = vmatpush2.msra.mxu0 0.0
    %892 = vmatprep.subr.mxu0 0.0
    %893 = vmatpush2.msra.mxu0 0.0
    %894 = vmatprep.subr.mxu0 0.0
    %895 = vmatpush2.msra.mxu0 0.0
    %896 = vmatprep.subr.mxu0 0.0
    %897 = vmatpush2.msra.mxu0 0.0
    %898 = vmatprep.subr.mxu0 0.0
    %899 = vmatpush2.msra.mxu0 0.0
    %900 = vmatprep.subr.mxu0 0.0
    %901 = vmatpush2.msra.mxu0 0.0
    %902 = vmatprep.subr.mxu0 0.0
    %903 = vmatpush2.msra.mxu0 0.0
    %904 = vmatprep.subr.mxu0 0.0
    %905 = vmatpush2.msra.mxu0 0.0
    %906 = vmatprep.subr.mxu0 0.0
    %907 = vmatpush2.msra.mxu0 0.0
    %908 = vmatprep.subr.mxu0 0.0
    %909 = vmatpush2.msra.mxu0 0.0
    %910 = vmatprep.subr.mxu0 0.0
    %911 = vmatpush2.msra.mxu0 0.0
    %912 = vmatprep.subr.mxu0 0.0
    %913 = vmatpush2.msra.mxu0 0.0
    %914 = vmatprep.mubr.f32.mxu0 0.0
    %v915 = vand.u32 %v58, 4294901760
    %v916 = vsub.f32 %v58, %v915
    %v917 = vand.u32 %v916, 4294901760
    %v918 = vsub.f32 %v916, %v917
    %v919 = vand.u32 %v918, 4294901760
    %920 = vmatmul.mubr.f32.gmra.mxu0 %v919
    %v921 = vpop.f32.mrf.mxu0
    %v922 = vadd.f32 0.0, %v921
    %v923 = vpop.f32.mrf.mxu0
    %924 = vmatprep.mubr.f32.mxu0 0.0
    %v925 = vand.u32 %v61, 4294901760
    %v926 = vsub.f32 %v61, %v925
    %v927 = vand.u32 %v926, 4294901760
    %v928 = vsub.f32 %v926, %v927
    %v929 = vand.u32 %v928, 4294901760
    %930 = vmatmul.mubr.f32.gmra.mxu0 %v929
    %v931 = vpop.f32.mrf.mxu0
    %v932 = vadd.f32 0.0, %v931
    %v933 = vpop.f32.mrf.mxu0
    %934 = vmatprep.mubr.f32.mxu0 0.0
    %v935 = vand.u32 %v64, 4294901760
    %v936 = vsub.f32 %v64, %v935
    %v937 = vand.u32 %v936, 4294901760
    %v938 = vsub.f32 %v936, %v937
    %v939 = vand.u32 %v938, 4294901760
    %940 = vmatmul.mubr.f32.gmra.mxu0 %v939
    %v941 = vpop.f32.mrf.mxu0
    %v942 = vadd.f32 0.0, %v941
    %v943 = vpop.f32.mrf.mxu0
    %944 = vmatprep.mubr.f32.mxu0 0.0
    %v945 = vand.u32 %v67, 4294901760
    %v946 = vsub.f32 %v67, %v945
    %v947 = vand.u32 %v946, 4294901760
    %v948 = vsub.f32 %v946, %v947
    %v949 = vand.u32 %v948, 4294901760
    %950 = vmatmul.mubr.f32.gmra.mxu0 %v949
    %v951 = vpop.f32.mrf.mxu0
    %v952 = vadd.f32 0.0, %v951
    %v953 = vpop.f32.mrf.mxu0
    %954 = vmatprep.mubr.f32.mxu0 0.0
    %v955 = vand.u32 %v70, 4294901760
    %v956 = vsub.f32 %v70, %v955
    %v957 = vand.u32 %v956, 4294901760
    %v958 = vsub.f32 %v956, %v957
    %v959 = vand.u32 %v958, 4294901760
    %960 = vmatmul.mubr.f32.gmra.mxu0 %v959
    %v961 = vpop.f32.mrf.mxu0
    %v962 = vadd.f32 0.0, %v961
    %v963 = vpop.f32.mrf.mxu0
    %964 = vmatprep.mubr.f32.mxu0 0.0
    %v965 = vand.u32 %v73, 4294901760
    %v966 = vsub.f32 %v73, %v965
    %v967 = vand.u32 %v966, 4294901760
    %v968 = vsub.f32 %v966, %v967
    %v969 = vand.u32 %v968, 4294901760
    %970 = vmatmul.mubr.f32.gmra.mxu0 %v969
    %v971 = vpop.f32.mrf.mxu0
    %v972 = vadd.f32 0.0, %v971
    %v973 = vpop.f32.mrf.mxu0
    %974 = vmatprep.mubr.f32.mxu0 0.0
    %v975 = vand.u32 %v76, 4294901760
    %v976 = vsub.f32 %v76, %v975
    %v977 = vand.u32 %v976, 4294901760
    %v978 = vsub.f32 %v976, %v977
    %v979 = vand.u32 %v978, 4294901760
    %980 = vmatmul.mubr.f32.gmra.mxu0 %v979
    %v981 = vpop.f32.mrf.mxu0
    %v982 = vadd.f32 0.0, %v981
    %v983 = vpop.f32.mrf.mxu0
    %984 = vmatprep.mubr.f32.mxu0 0.0
    %v985 = vand.u32 %v79, 4294901760
    %v986 = vsub.f32 %v79, %v985
    %v987 = vand.u32 %v986, 4294901760
    %v988 = vsub.f32 %v986, %v987
    %v989 = vand.u32 %v988, 4294901760
    %990 = vmatmul.mubr.f32.gmra.mxu0 %v989
    %v991 = vpop.f32.mrf.mxu0
    %v992 = vadd.f32 0.0, %v991
    %v993 = vpop.f32.mrf.mxu0
    %994 = vdwg.mxu0
    %995 = vmatprep.subr.mxu0 0.0
    %996 = vmatpush1.msra.mxu0 0.0
    %997 = vmatprep.subr.mxu0 0.0
    %998 = vmatpush1.msra.mxu0 0.0
    %999 = vmatprep.subr.mxu0 0.0
    %1000 = vmatpush1.msra.mxu0 0.0
    %1001 = vmatprep.subr.mxu0 0.0
    %1002 = vmatpush1.msra.mxu0 0.0
    %1003 = vmatprep.subr.mxu0 0.0
    %1004 = vmatpush1.msra.mxu0 0.0
    %1005 = vmatprep.subr.mxu0 0.0
    %1006 = vmatpush1.msra.mxu0 0.0
    %1007 = vmatprep.subr.mxu0 0.0
    %1008 = vmatpush1.msra.mxu0 0.0
    %1009 = vmatprep.subr.mxu0 0.0
    %1010 = vmatpush1.msra.mxu0 0.0
    %1011 = vmatprep.subr.mxu0 0.0
    %1012 = vmatpush1.msra.mxu0 0.0
    %1013 = vmatprep.subr.mxu0 0.0
    %1014 = vmatpush1.msra.mxu0 0.0
    %1015 = vmatprep.subr.mxu0 0.0
    %1016 = vmatpush1.msra.mxu0 0.0
    %1017 = vmatprep.subr.mxu0 0.0
    %1018 = vmatpush1.msra.mxu0 0.0
    %1019 = vmatprep.subr.mxu0 0.0
    %1020 = vmatpush1.msra.mxu0 0.0
    %1021 = vmatprep.subr.mxu0 0.0
    %1022 = vmatpush1.msra.mxu0 0.0
    %1023 = vmatprep.subr.mxu0 0.0
    %v1024 = vand.u32 %v846, 4294901760
    %v1025 = vsub.f32 %v846, %v1024
    %v1026 = vand.u32 %v1025, 4294901760
    %v1027 = vsub.f32 %v1025, %v1026
    %v1028 = vand.u32 %v1027, 4294901760
    %1029 = vmatpush1.msra.mxu0 %v1028
    %1030 = vmatprep.subr.mxu0 0.0
    %v1031 = vand.u32 %v46, 4294901760
    %v1032 = vsub.f32 %v46, %v1031
    %v1033 = vand.u32 %v1032, 4294901760
    %v1034 = vsub.f32 %v1032, %v1033
    %v1035 = vand.u32 %v1034, 4294901760
    %1036 = vmatpush1.msra.mxu0 %v1035
    %1037 = vmatprep.subr.mxu0 0.0
    %1038 = vmatpush2.msra.mxu0 0.0
    %1039 = vmatprep.subr.mxu0 0.0
    %1040 = vmatpush2.msra.mxu0 0.0
    %1041 = vmatprep.subr.mxu0 0.0
    %1042 = vmatpush2.msra.mxu0 0.0
    %1043 = vmatprep.subr.mxu0 0.0
    %1044 = vmatpush2.msra.mxu0 0.0
    %1045 = vmatprep.subr.mxu0 0.0
    %1046 = vmatpush2.msra.mxu0 0.0
    %1047 = vmatprep.subr.mxu0 0.0
    %1048 = vmatpush2.msra.mxu0 0.0
    %1049 = vmatprep.subr.mxu0 0.0
    %1050 = vmatpush2.msra.mxu0 0.0
    %1051 = vmatprep.subr.mxu0 0.0
    %1052 = vmatpush2.msra.mxu0 0.0
    %1053 = vmatprep.subr.mxu0 0.0
    %1054 = vmatpush2.msra.mxu0 0.0
    %1055 = vmatprep.subr.mxu0 0.0
    %1056 = vmatpush2.msra.mxu0 0.0
    %1057 = vmatprep.subr.mxu0 0.0
    %1058 = vmatpush2.msra.mxu0 0.0
    %1059 = vmatprep.subr.mxu0 0.0
    %1060 = vmatpush2.msra.mxu0 0.0
    %1061 = vmatprep.subr.mxu0 0.0
    %1062 = vmatpush2.msra.mxu0 0.0
    %1063 = vmatprep.subr.mxu0 0.0
    %1064 = vmatpush2.msra.mxu0 0.0
    %1065 = vmatprep.subr.mxu0 0.0
    %1066 = vmatpush2.msra.mxu0 0.0
    %1067 = vmatprep.subr.mxu0 0.0
    %1068 = vmatpush2.msra.mxu0 0.0
    %1069 = vmatprep.mubr.f32.mxu0 0.0
    %v1070 = vand.u32 %v58, 4294901760
    %1071 = vmatmul.mubr.f32.gmra.mxu0 %v1070
    %v1072 = vpop.f32.mrf.mxu0
    %v1073 = vadd.f32 %v922, %v1072
    %v1074 = vpop.f32.mrf.mxu0
    %1075 = vmatprep.mubr.f32.mxu0 0.0
    %v1076 = vand.u32 %v61, 4294901760
    %1077 = vmatmul.mubr.f32.gmra.mxu0 %v1076
    %v1078 = vpop.f32.mrf.mxu0
    %v1079 = vadd.f32 %v932, %v1078
    %v1080 = vpop.f32.mrf.mxu0
    %1081 = vmatprep.mubr.f32.mxu0 0.0
    %v1082 = vand.u32 %v64, 4294901760
    %1083 = vmatmul.mubr.f32.gmra.mxu0 %v1082
    %v1084 = vpop.f32.mrf.mxu0
    %v1085 = vadd.f32 %v942, %v1084
    %v1086 = vpop.f32.mrf.mxu0
    %1087 = vmatprep.mubr.f32.mxu0 0.0
    %v1088 = vand.u32 %v67, 4294901760
    %1089 = vmatmul.mubr.f32.gmra.mxu0 %v1088
    %v1090 = vpop.f32.mrf.mxu0
    %v1091 = vadd.f32 %v952, %v1090
    %v1092 = vpop.f32.mrf.mxu0
    %1093 = vmatprep.mubr.f32.mxu0 0.0
    %v1094 = vand.u32 %v70, 4294901760
    %1095 = vmatmul.mubr.f32.gmra.mxu0 %v1094
    %v1096 = vpop.f32.mrf.mxu0
    %v1097 = vadd.f32 %v962, %v1096
    %v1098 = vpop.f32.mrf.mxu0
    %1099 = vmatprep.mubr.f32.mxu0 0.0
    %v1100 = vand.u32 %v73, 4294901760
    %1101 = vmatmul.mubr.f32.gmra.mxu0 %v1100
    %v1102 = vpop.f32.mrf.mxu0
    %v1103 = vadd.f32 %v972, %v1102
    %v1104 = vpop.f32.mrf.mxu0
    %1105 = vmatprep.mubr.f32.mxu0 0.0
    %v1106 = vand.u32 %v76, 4294901760
    %1107 = vmatmul.mubr.f32.gmra.mxu0 %v1106
    %v1108 = vpop.f32.mrf.mxu0
    %v1109 = vadd.f32 %v982, %v1108
    %v1110 = vpop.f32.mrf.mxu0
    %1111 = vmatprep.mubr.f32.mxu0 0.0
    %v1112 = vand.u32 %v79, 4294901760
    %1113 = vmatmul.mubr.f32.gmra.mxu0 %v1112
    %v1114 = vpop.f32.mrf.mxu0
    %v1115 = vadd.f32 %v992, %v1114
    %v1116 = vpop.f32.mrf.mxu0
    %1117 = vdwg.mxu0
    %1118 = vmatprep.subr.mxu0 0.0
    %1119 = vmatpush1.msra.mxu0 0.0
    %1120 = vmatprep.subr.mxu0 0.0
    %1121 = vmatpush1.msra.mxu0 0.0
    %1122 = vmatprep.subr.mxu0 0.0
    %1123 = vmatpush1.msra.mxu0 0.0
    %1124 = vmatprep.subr.mxu0 0.0
    %1125 = vmatpush1.msra.mxu0 0.0
    %1126 = vmatprep.subr.mxu0 0.0
    %1127 = vmatpush1.msra.mxu0 0.0
    %1128 = vmatprep.subr.mxu0 0.0
    %1129 = vmatpush1.msra.mxu0 0.0
    %1130 = vmatprep.subr.mxu0 0.0
    %1131 = vmatpush1.msra.mxu0 0.0
    %1132 = vmatprep.subr.mxu0 0.0
    %1133 = vmatpush1.msra.mxu0 0.0
    %1134 = vmatprep.subr.mxu0 0.0
    %1135 = vmatpush1.msra.mxu0 0.0
    %1136 = vmatprep.subr.mxu0 0.0
    %1137 = vmatpush1.msra.mxu0 0.0
    %1138 = vmatprep.subr.mxu0 0.0
    %1139 = vmatpush1.msra.mxu0 0.0
    %1140 = vmatprep.subr.mxu0 0.0
    %1141 = vmatpush1.msra.mxu0 0.0
    %1142 = vmatprep.subr.mxu0 0.0
    %1143 = vmatpush1.msra.mxu0 0.0
    %1144 = vmatprep.subr.mxu0 0.0
    %1145 = vmatpush1.msra.mxu0 0.0
    %1146 = vmatprep.subr.mxu0 0.0
    %v1147 = vand.u32 %v846, 4294901760
    %v1148 = vsub.f32 %v846, %v1147
    %1149 = vmatpush1.msra.mxu0 %v1148
    %1150 = vmatprep.subr.mxu0 0.0
    %v1151 = vand.u32 %v46, 4294901760
    %v1152 = vsub.f32 %v46, %v1151
    %1153 = vmatpush1.msra.mxu0 %v1152
    %1154 = vmatprep.subr.mxu0 0.0
    %1155 = vmatpush2.msra.mxu0 0.0
    %1156 = vmatprep.subr.mxu0 0.0
    %1157 = vmatpush2.msra.mxu0 0.0
    %1158 = vmatprep.subr.mxu0 0.0
    %1159 = vmatpush2.msra.mxu0 0.0
    %1160 = vmatprep.subr.mxu0 0.0
    %1161 = vmatpush2.msra.mxu0 0.0
    %1162 = vmatprep.subr.mxu0 0.0
    %1163 = vmatpush2.msra.mxu0 0.0
    %1164 = vmatprep.subr.mxu0 0.0
    %1165 = vmatpush2.msra.mxu0 0.0
    %1166 = vmatprep.subr.mxu0 0.0
    %1167 = vmatpush2.msra.mxu0 0.0
    %1168 = vmatprep.subr.mxu0 0.0
    %1169 = vmatpush2.msra.mxu0 0.0
    %1170 = vmatprep.subr.mxu0 0.0
    %1171 = vmatpush2.msra.mxu0 0.0
    %1172 = vmatprep.subr.mxu0 0.0
    %1173 = vmatpush2.msra.mxu0 0.0
    %1174 = vmatprep.subr.mxu0 0.0
    %1175 = vmatpush2.msra.mxu0 0.0
    %1176 = vmatprep.subr.mxu0 0.0
    %1177 = vmatpush2.msra.mxu0 0.0
    %1178 = vmatprep.subr.mxu0 0.0
    %1179 = vmatpush2.msra.mxu0 0.0
    %1180 = vmatprep.subr.mxu0 0.0
    %1181 = vmatpush2.msra.mxu0 0.0
    %1182 = vmatprep.subr.mxu0 0.0
    %1183 = vmatpush2.msra.mxu0 0.0
    %1184 = vmatprep.subr.mxu0 0.0
    %1185 = vmatpush2.msra.mxu0 0.0
    %1186 = vmatprep.mubr.f32.mxu0 0.0
    %v1187 = vand.u32 %v58, 4294901760
    %v1188 = vsub.f32 %v58, %v1187
    %1189 = vmatmul.mubr.f32.gmra.mxu0 %v1188
    %v1190 = vpop.f32.mrf.mxu0
    %v1191 = vadd.f32 %v1073, %v1190
    %v1192 = vpop.f32.mrf.mxu0
    %1193 = vmatprep.mubr.f32.mxu0 0.0
    %v1194 = vand.u32 %v61, 4294901760
    %v1195 = vsub.f32 %v61, %v1194
    %1196 = vmatmul.mubr.f32.gmra.mxu0 %v1195
    %v1197 = vpop.f32.mrf.mxu0
    %v1198 = vadd.f32 %v1079, %v1197
    %v1199 = vpop.f32.mrf.mxu0
    %1200 = vmatprep.mubr.f32.mxu0 0.0
    %v1201 = vand.u32 %v64, 4294901760
    %v1202 = vsub.f32 %v64, %v1201
    %1203 = vmatmul.mubr.f32.gmra.mxu0 %v1202
    %v1204 = vpop.f32.mrf.mxu0
    %v1205 = vadd.f32 %v1085, %v1204
    %v1206 = vpop.f32.mrf.mxu0
    %1207 = vmatprep.mubr.f32.mxu0 0.0
    %v1208 = vand.u32 %v67, 4294901760
    %v1209 = vsub.f32 %v67, %v1208
    %1210 = vmatmul.mubr.f32.gmra.mxu0 %v1209
    %v1211 = vpop.f32.mrf.mxu0
    %v1212 = vadd.f32 %v1091, %v1211
    %v1213 = vpop.f32.mrf.mxu0
    %1214 = vmatprep.mubr.f32.mxu0 0.0
    %v1215 = vand.u32 %v70, 4294901760
    %v1216 = vsub.f32 %v70, %v1215
    %1217 = vmatmul.mubr.f32.gmra.mxu0 %v1216
    %v1218 = vpop.f32.mrf.mxu0
    %v1219 = vadd.f32 %v1097, %v1218
    %v1220 = vpop.f32.mrf.mxu0
    %1221 = vmatprep.mubr.f32.mxu0 0.0
    %v1222 = vand.u32 %v73, 4294901760
    %v1223 = vsub.f32 %v73, %v1222
    %1224 = vmatmul.mubr.f32.gmra.mxu0 %v1223
    %v1225 = vpop.f32.mrf.mxu0
    %v1226 = vadd.f32 %v1103, %v1225
    %v1227 = vpop.f32.mrf.mxu0
    %1228 = vmatprep.mubr.f32.mxu0 0.0
    %v1229 = vand.u32 %v76, 4294901760
    %v1230 = vsub.f32 %v76, %v1229
    %1231 = vmatmul.mubr.f32.gmra.mxu0 %v1230
    %v1232 = vpop.f32.mrf.mxu0
    %v1233 = vadd.f32 %v1109, %v1232
    %v1234 = vpop.f32.mrf.mxu0
    %1235 = vmatprep.mubr.f32.mxu0 0.0
    %v1236 = vand.u32 %v79, 4294901760
    %v1237 = vsub.f32 %v79, %v1236
    %1238 = vmatmul.mubr.f32.gmra.mxu0 %v1237
    %v1239 = vpop.f32.mrf.mxu0
    %v1240 = vadd.f32 %v1115, %v1239
    %v1241 = vpop.f32.mrf.mxu0
    %1242 = vdwg.mxu0
    %1243 = vmatprep.subr.mxu0 0.0
    %1244 = vmatpush1.msra.mxu0 0.0
    %1245 = vmatprep.subr.mxu0 0.0
    %1246 = vmatpush1.msra.mxu0 0.0
    %1247 = vmatprep.subr.mxu0 0.0
    %1248 = vmatpush1.msra.mxu0 0.0
    %1249 = vmatprep.subr.mxu0 0.0
    %1250 = vmatpush1.msra.mxu0 0.0
    %1251 = vmatprep.subr.mxu0 0.0
    %1252 = vmatpush1.msra.mxu0 0.0
    %1253 = vmatprep.subr.mxu0 0.0
    %1254 = vmatpush1.msra.mxu0 0.0
    %1255 = vmatprep.subr.mxu0 0.0
    %1256 = vmatpush1.msra.mxu0 0.0
    %1257 = vmatprep.subr.mxu0 0.0
    %1258 = vmatpush1.msra.mxu0 0.0
    %1259 = vmatprep.subr.mxu0 0.0
    %1260 = vmatpush1.msra.mxu0 0.0
    %1261 = vmatprep.subr.mxu0 0.0
    %1262 = vmatpush1.msra.mxu0 0.0
    %1263 = vmatprep.subr.mxu0 0.0
    %1264 = vmatpush1.msra.mxu0 0.0
    %1265 = vmatprep.subr.mxu0 0.0
    %1266 = vmatpush1.msra.mxu0 0.0
    %1267 = vmatprep.subr.mxu0 0.0
    %1268 = vmatpush1.msra.mxu0 0.0
    %1269 = vmatprep.subr.mxu0 0.0
    %1270 = vmatpush1.msra.mxu0 0.0
    %1271 = vmatprep.subr.mxu0 0.0
    %v1272 = vand.u32 %v846, 4294901760
    %1273 = vmatpush1.msra.mxu0 %v1272
    %1274 = vmatprep.subr.mxu0 0.0
    %v1275 = vand.u32 %v46, 4294901760
    %1276 = vmatpush1.msra.mxu0 %v1275
    %1277 = vmatprep.subr.mxu0 0.0
    %1278 = vmatpush2.msra.mxu0 0.0
    %1279 = vmatprep.subr.mxu0 0.0
    %1280 = vmatpush2.msra.mxu0 0.0
    %1281 = vmatprep.subr.mxu0 0.0
    %1282 = vmatpush2.msra.mxu0 0.0
    %1283 = vmatprep.subr.mxu0 0.0
    %1284 = vmatpush2.msra.mxu0 0.0
    %1285 = vmatprep.subr.mxu0 0.0
    %1286 = vmatpush2.msra.mxu0 0.0
    %1287 = vmatprep.subr.mxu0 0.0
    %1288 = vmatpush2.msra.mxu0 0.0
    %1289 = vmatprep.subr.mxu0 0.0
    %1290 = vmatpush2.msra.mxu0 0.0
    %1291 = vmatprep.subr.mxu0 0.0
    %1292 = vmatpush2.msra.mxu0 0.0
    %1293 = vmatprep.subr.mxu0 0.0
    %1294 = vmatpush2.msra.mxu0 0.0
    %1295 = vmatprep.subr.mxu0 0.0
    %1296 = vmatpush2.msra.mxu0 0.0
    %1297 = vmatprep.subr.mxu0 0.0
    %1298 = vmatpush2.msra.mxu0 0.0
    %1299 = vmatprep.subr.mxu0 0.0
    %1300 = vmatpush2.msra.mxu0 0.0
    %1301 = vmatprep.subr.mxu0 0.0
    %1302 = vmatpush2.msra.mxu0 0.0
    %1303 = vmatprep.subr.mxu0 0.0
    %1304 = vmatpush2.msra.mxu0 0.0
    %1305 = vmatprep.subr.mxu0 0.0
    %1306 = vmatpush2.msra.mxu0 0.0
    %1307 = vmatprep.subr.mxu0 0.0
    %1308 = vmatpush2.msra.mxu0 0.0
    %1309 = vmatprep.mubr.f32.mxu0 0.0
    %v1310 = vand.u32 %v58, 4294901760
    %v1311 = vsub.f32 %v58, %v1310
    %v1312 = vand.u32 %v1311, 4294901760
    %1313 = vmatmul.mubr.f32.gmra.mxu0 %v1312
    %v1314 = vpop.f32.mrf.mxu0
    %v1315 = vadd.f32 %v1191, %v1314
    %v1316 = vpop.f32.mrf.mxu0
    %1317 = vmatprep.mubr.f32.mxu0 0.0
    %v1318 = vand.u32 %v61, 4294901760
    %v1319 = vsub.f32 %v61, %v1318
    %v1320 = vand.u32 %v1319, 4294901760
    %1321 = vmatmul.mubr.f32.gmra.mxu0 %v1320
    %v1322 = vpop.f32.mrf.mxu0
    %v1323 = vadd.f32 %v1198, %v1322
    %v1324 = vpop.f32.mrf.mxu0
    %1325 = vmatprep.mubr.f32.mxu0 0.0
    %v1326 = vand.u32 %v64, 4294901760
    %v1327 = vsub.f32 %v64, %v1326
    %v1328 = vand.u32 %v1327, 4294901760
    %1329 = vmatmul.mubr.f32.gmra.mxu0 %v1328
    %v1330 = vpop.f32.mrf.mxu0
    %v1331 = vadd.f32 %v1205, %v1330
    %v1332 = vpop.f32.mrf.mxu0
    %1333 = vmatprep.mubr.f32.mxu0 0.0
    %v1334 = vand.u32 %v67, 4294901760
    %v1335 = vsub.f32 %v67, %v1334
    %v1336 = vand.u32 %v1335, 4294901760
    %1337 = vmatmul.mubr.f32.gmra.mxu0 %v1336
    %v1338 = vpop.f32.mrf.mxu0
    %v1339 = vadd.f32 %v1212, %v1338
    %v1340 = vpop.f32.mrf.mxu0
    %1341 = vmatprep.mubr.f32.mxu0 0.0
    %v1342 = vand.u32 %v70, 4294901760
    %v1343 = vsub.f32 %v70, %v1342
    %v1344 = vand.u32 %v1343, 4294901760
    %1345 = vmatmul.mubr.f32.gmra.mxu0 %v1344
    %v1346 = vpop.f32.mrf.mxu0
    %v1347 = vadd.f32 %v1219, %v1346
    %v1348 = vpop.f32.mrf.mxu0
    %1349 = vmatprep.mubr.f32.mxu0 0.0
    %v1350 = vand.u32 %v73, 4294901760
    %v1351 = vsub.f32 %v73, %v1350
    %v1352 = vand.u32 %v1351, 4294901760
    %1353 = vmatmul.mubr.f32.gmra.mxu0 %v1352
    %v1354 = vpop.f32.mrf.mxu0
    %v1355 = vadd.f32 %v1226, %v1354
    %v1356 = vpop.f32.mrf.mxu0
    %1357 = vmatprep.mubr.f32.mxu0 0.0
    %v1358 = vand.u32 %v76, 4294901760
    %v1359 = vsub.f32 %v76, %v1358
    %v1360 = vand.u32 %v1359, 4294901760
    %1361 = vmatmul.mubr.f32.gmra.mxu0 %v1360
    %v1362 = vpop.f32.mrf.mxu0
    %v1363 = vadd.f32 %v1233, %v1362
    %v1364 = vpop.f32.mrf.mxu0
    %1365 = vmatprep.mubr.f32.mxu0 0.0
    %v1366 = vand.u32 %v79, 4294901760
    %v1367 = vsub.f32 %v79, %v1366
    %v1368 = vand.u32 %v1367, 4294901760
    %1369 = vmatmul.mubr.f32.gmra.mxu0 %v1368
    %v1370 = vpop.f32.mrf.mxu0
    %v1371 = vadd.f32 %v1240, %v1370
    %v1372 = vpop.f32.mrf.mxu0
    %1373 = vdwg.mxu0
    %1374 = vmatprep.subr.mxu0 0.0
    %1375 = vmatpush1.msra.mxu0 0.0
    %1376 = vmatprep.subr.mxu0 0.0
    %1377 = vmatpush1.msra.mxu0 0.0
    %1378 = vmatprep.subr.mxu0 0.0
    %1379 = vmatpush1.msra.mxu0 0.0
    %1380 = vmatprep.subr.mxu0 0.0
    %1381 = vmatpush1.msra.mxu0 0.0
    %1382 = vmatprep.subr.mxu0 0.0
    %1383 = vmatpush1.msra.mxu0 0.0
    %1384 = vmatprep.subr.mxu0 0.0
    %1385 = vmatpush1.msra.mxu0 0.0
    %1386 = vmatprep.subr.mxu0 0.0
    %1387 = vmatpush1.msra.mxu0 0.0
    %1388 = vmatprep.subr.mxu0 0.0
    %1389 = vmatpush1.msra.mxu0 0.0
    %1390 = vmatprep.subr.mxu0 0.0
    %1391 = vmatpush1.msra.mxu0 0.0
    %1392 = vmatprep.subr.mxu0 0.0
    %1393 = vmatpush1.msra.mxu0 0.0
    %1394 = vmatprep.subr.mxu0 0.0
    %1395 = vmatpush1.msra.mxu0 0.0
    %1396 = vmatprep.subr.mxu0 0.0
    %1397 = vmatpush1.msra.mxu0 0.0
    %1398 = vmatprep.subr.mxu0 0.0
    %1399 = vmatpush1.msra.mxu0 0.0
    %1400 = vmatprep.subr.mxu0 0.0
    %1401 = vmatpush1.msra.mxu0 0.0
    %1402 = vmatprep.subr.mxu0 0.0
    %v1403 = vand.u32 %v846, 4294901760
    %v1404 = vsub.f32 %v846, %v1403
    %v1405 = vand.u32 %v1404, 4294901760
    %1406 = vmatpush1.msra.mxu0 %v1405
    %1407 = vmatprep.subr.mxu0 0.0
    %v1408 = vand.u32 %v46, 4294901760
    %v1409 = vsub.f32 %v46, %v1408
    %v1410 = vand.u32 %v1409, 4294901760
    %1411 = vmatpush1.msra.mxu0 %v1410
    %1412 = vmatprep.subr.mxu0 0.0
    %1413 = vmatpush2.msra.mxu0 0.0
    %1414 = vmatprep.subr.mxu0 0.0
    %1415 = vmatpush2.msra.mxu0 0.0
    %1416 = vmatprep.subr.mxu0 0.0
    %1417 = vmatpush2.msra.mxu0 0.0
    %1418 = vmatprep.subr.mxu0 0.0
    %1419 = vmatpush2.msra.mxu0 0.0
    %1420 = vmatprep.subr.mxu0 0.0
    %1421 = vmatpush2.msra.mxu0 0.0
    %1422 = vmatprep.subr.mxu0 0.0
    %1423 = vmatpush2.msra.mxu0 0.0
    %1424 = vmatprep.subr.mxu0 0.0
    %1425 = vmatpush2.msra.mxu0 0.0
    %1426 = vmatprep.subr.mxu0 0.0
    %1427 = vmatpush2.msra.mxu0 0.0
    %1428 = vmatprep.subr.mxu0 0.0
    %1429 = vmatpush2.msra.mxu0 0.0
    %1430 = vmatprep.subr.mxu0 0.0
    %1431 = vmatpush2.msra.mxu0 0.0
    %1432 = vmatprep.subr.mxu0 0.0
    %1433 = vmatpush2.msra.mxu0 0.0
    %1434 = vmatprep.subr.mxu0 0.0
    %1435 = vmatpush2.msra.mxu0 0.0
    %1436 = vmatprep.subr.mxu0 0.0
    %1437 = vmatpush2.msra.mxu0 0.0
    %1438 = vmatprep.subr.mxu0 0.0
    %1439 = vmatpush2.msra.mxu0 0.0
    %1440 = vmatprep.subr.mxu0 0.0
    %1441 = vmatpush2.msra.mxu0 0.0
    %1442 = vmatprep.subr.mxu0 0.0
    %1443 = vmatpush2.msra.mxu0 0.0
    %1444 = vmatprep.mubr.f32.mxu0 0.0
    %v1445 = vand.u32 %v58, 4294901760
    %1446 = vmatmul.mubr.f32.gmra.mxu0 %v1445
    %v1447 = vpop.f32.mrf.mxu0
    %v1448 = vadd.f32 %v1315, %v1447
    %v1449 = vpop.f32.mrf.mxu0
    %1450 = vmatprep.mubr.f32.mxu0 0.0
    %v1451 = vand.u32 %v61, 4294901760
    %1452 = vmatmul.mubr.f32.gmra.mxu0 %v1451
    %v1453 = vpop.f32.mrf.mxu0
    %v1454 = vadd.f32 %v1323, %v1453
    %v1455 = vpop.f32.mrf.mxu0
    %1456 = vmatprep.mubr.f32.mxu0 0.0
    %v1457 = vand.u32 %v64, 4294901760
    %1458 = vmatmul.mubr.f32.gmra.mxu0 %v1457
    %v1459 = vpop.f32.mrf.mxu0
    %v1460 = vadd.f32 %v1331, %v1459
    %v1461 = vpop.f32.mrf.mxu0
    %1462 = vmatprep.mubr.f32.mxu0 0.0
    %v1463 = vand.u32 %v67, 4294901760
    %1464 = vmatmul.mubr.f32.gmra.mxu0 %v1463
    %v1465 = vpop.f32.mrf.mxu0
    %v1466 = vadd.f32 %v1339, %v1465
    %v1467 = vpop.f32.mrf.mxu0
    %1468 = vmatprep.mubr.f32.mxu0 0.0
    %v1469 = vand.u32 %v70, 4294901760
    %1470 = vmatmul.mubr.f32.gmra.mxu0 %v1469
    %v1471 = vpop.f32.mrf.mxu0
    %v1472 = vadd.f32 %v1347, %v1471
    %v1473 = vpop.f32.mrf.mxu0
    %1474 = vmatprep.mubr.f32.mxu0 0.0
    %v1475 = vand.u32 %v73, 4294901760
    %1476 = vmatmul.mubr.f32.gmra.mxu0 %v1475
    %v1477 = vpop.f32.mrf.mxu0
    %v1478 = vadd.f32 %v1355, %v1477
    %v1479 = vpop.f32.mrf.mxu0
    %1480 = vmatprep.mubr.f32.mxu0 0.0
    %v1481 = vand.u32 %v76, 4294901760
    %1482 = vmatmul.mubr.f32.gmra.mxu0 %v1481
    %v1483 = vpop.f32.mrf.mxu0
    %v1484 = vadd.f32 %v1363, %v1483
    %v1485 = vpop.f32.mrf.mxu0
    %1486 = vmatprep.mubr.f32.mxu0 0.0
    %v1487 = vand.u32 %v79, 4294901760
    %1488 = vmatmul.mubr.f32.gmra.mxu0 %v1487
    %v1489 = vpop.f32.mrf.mxu0
    %v1490 = vadd.f32 %v1371, %v1489
    %v1491 = vpop.f32.mrf.mxu0
    %1492 = vdwg.mxu0
    %1493 = vmatprep.subr.mxu0 0.0
    %1494 = vmatpush1.msra.mxu0 0.0
    %1495 = vmatprep.subr.mxu0 0.0
    %1496 = vmatpush1.msra.mxu0 0.0
    %1497 = vmatprep.subr.mxu0 0.0
    %1498 = vmatpush1.msra.mxu0 0.0
    %1499 = vmatprep.subr.mxu0 0.0
    %1500 = vmatpush1.msra.mxu0 0.0
    %1501 = vmatprep.subr.mxu0 0.0
    %1502 = vmatpush1.msra.mxu0 0.0
    %1503 = vmatprep.subr.mxu0 0.0
    %1504 = vmatpush1.msra.mxu0 0.0
    %1505 = vmatprep.subr.mxu0 0.0
    %1506 = vmatpush1.msra.mxu0 0.0
    %1507 = vmatprep.subr.mxu0 0.0
    %1508 = vmatpush1.msra.mxu0 0.0
    %1509 = vmatprep.subr.mxu0 0.0
    %1510 = vmatpush1.msra.mxu0 0.0
    %1511 = vmatprep.subr.mxu0 0.0
    %1512 = vmatpush1.msra.mxu0 0.0
    %1513 = vmatprep.subr.mxu0 0.0
    %1514 = vmatpush1.msra.mxu0 0.0
    %1515 = vmatprep.subr.mxu0 0.0
    %1516 = vmatpush1.msra.mxu0 0.0
    %1517 = vmatprep.subr.mxu0 0.0
    %1518 = vmatpush1.msra.mxu0 0.0
    %1519 = vmatprep.subr.mxu0 0.0
    %1520 = vmatpush1.msra.mxu0 0.0
    %1521 = vmatprep.subr.mxu0 0.0
    %v1522 = vand.u32 %v846, 4294901760
    %1523 = vmatpush1.msra.mxu0 %v1522
    %1524 = vmatprep.subr.mxu0 0.0
    %v1525 = vand.u32 %v46, 4294901760
    %1526 = vmatpush1.msra.mxu0 %v1525
    %1527 = vmatprep.subr.mxu0 0.0
    %1528 = vmatpush2.msra.mxu0 0.0
    %1529 = vmatprep.subr.mxu0 0.0
    %1530 = vmatpush2.msra.mxu0 0.0
    %1531 = vmatprep.subr.mxu0 0.0
    %1532 = vmatpush2.msra.mxu0 0.0
    %1533 = vmatprep.subr.mxu0 0.0
    %1534 = vmatpush2.msra.mxu0 0.0
    %1535 = vmatprep.subr.mxu0 0.0
    %1536 = vmatpush2.msra.mxu0 0.0
    %1537 = vmatprep.subr.mxu0 0.0
    %1538 = vmatpush2.msra.mxu0 0.0
    %1539 = vmatprep.subr.mxu0 0.0
    %1540 = vmatpush2.msra.mxu0 0.0
    %1541 = vmatprep.subr.mxu0 0.0
    %1542 = vmatpush2.msra.mxu0 0.0
    %1543 = vmatprep.subr.mxu0 0.0
    %1544 = vmatpush2.msra.mxu0 0.0
    %1545 = vmatprep.subr.mxu0 0.0
    %1546 = vmatpush2.msra.mxu0 0.0
    %1547 = vmatprep.subr.mxu0 0.0
    %1548 = vmatpush2.msra.mxu0 0.0
    %1549 = vmatprep.subr.mxu0 0.0
    %1550 = vmatpush2.msra.mxu0 0.0
    %1551 = vmatprep.subr.mxu0 0.0
    %1552 = vmatpush2.msra.mxu0 0.0
    %1553 = vmatprep.subr.mxu0 0.0
    %1554 = vmatpush2.msra.mxu0 0.0
    %1555 = vmatprep.subr.mxu0 0.0
    %1556 = vmatpush2.msra.mxu0 0.0
    %1557 = vmatprep.subr.mxu0 0.0
    %1558 = vmatpush2.msra.mxu0 0.0
    %1559 = vmatprep.mubr.f32.mxu0 0.0
    %v1560 = vand.u32 %v58, 4294901760
    %1561 = vmatmul.mubr.f32.gmra.mxu0 %v1560
    %v1562 = vpop.f32.mrf.mxu0
    %v1563 = vadd.f32 %v1448, %v1562
    %v1564 = vpop.f32.mrf.mxu0
    %1565 = vmatprep.mubr.f32.mxu0 0.0
    %v1566 = vand.u32 %v61, 4294901760
    %1567 = vmatmul.mubr.f32.gmra.mxu0 %v1566
    %v1568 = vpop.f32.mrf.mxu0
    %v1569 = vadd.f32 %v1454, %v1568
    %v1570 = vpop.f32.mrf.mxu0
    %1571 = vmatprep.mubr.f32.mxu0 0.0
    %v1572 = vand.u32 %v64, 4294901760
    %1573 = vmatmul.mubr.f32.gmra.mxu0 %v1572
    %v1574 = vpop.f32.mrf.mxu0
    %v1575 = vadd.f32 %v1460, %v1574
    %v1576 = vpop.f32.mrf.mxu0
    %1577 = vmatprep.mubr.f32.mxu0 0.0
    %v1578 = vand.u32 %v67, 4294901760
    %1579 = vmatmul.mubr.f32.gmra.mxu0 %v1578
    %v1580 = vpop.f32.mrf.mxu0
    %v1581 = vadd.f32 %v1466, %v1580
    %v1582 = vpop.f32.mrf.mxu0
    %1583 = vmatprep.mubr.f32.mxu0 0.0
    %v1584 = vand.u32 %v70, 4294901760
    %1585 = vmatmul.mubr.f32.gmra.mxu0 %v1584
    %v1586 = vpop.f32.mrf.mxu0
    %v1587 = vadd.f32 %v1472, %v1586
    %v1588 = vpop.f32.mrf.mxu0
    %1589 = vmatprep.mubr.f32.mxu0 0.0
    %v1590 = vand.u32 %v73, 4294901760
    %1591 = vmatmul.mubr.f32.gmra.mxu0 %v1590
    %v1592 = vpop.f32.mrf.mxu0
    %v1593 = vadd.f32 %v1478, %v1592
    %v1594 = vpop.f32.mrf.mxu0
    %1595 = vmatprep.mubr.f32.mxu0 0.0
    %v1596 = vand.u32 %v76, 4294901760
    %1597 = vmatmul.mubr.f32.gmra.mxu0 %v1596
    %v1598 = vpop.f32.mrf.mxu0
    %v1599 = vadd.f32 %v1484, %v1598
    %v1600 = vpop.f32.mrf.mxu0
    %1601 = vmatprep.mubr.f32.mxu0 0.0
    %v1602 = vand.u32 %v79, 4294901760
    %1603 = vmatmul.mubr.f32.gmra.mxu0 %v1602
    %v1604 = vpop.f32.mrf.mxu0
    %v1605 = vadd.f32 %v1490, %v1604
    %v1606 = vpop.f32.mrf.mxu0
    %1607 = vdwg.mxu0
    %v1608 = vmul.f32 %v800, %v1563
    %v1609 = vmul.f32 %v806, %v1569
    %v1610 = vmul.f32 %v812, %v1575
    %v1611 = vmul.f32 %v818, %v1581
    %v1612 = vmul.f32 %v824, %v1587
    %v1613 = vmul.f32 %v830, %v1593
    %v1614 = vmul.f32 %v836, %v1599
    %v1615 = vmul.f32 %v842, %v1605
    %s1616 = sld [smem:[#allocation2]]
    %v1617 = vstv %s1616
    %vm1618 = vcmask 523264
    %v1620 = vsel %vm1618, %v1617, 0
    %1622 = vmatprep.subr.mxu0 0.0
    %1623 = vmatpush1.msra.mxu0 0.0
    %1624 = vmatprep.subr.mxu0 0.0
    %1625 = vmatpush1.msra.mxu0 0.0
    %1626 = vmatprep.subr.mxu0 0.0
    %1627 = vmatpush1.msra.mxu0 0.0
    %1628 = vmatprep.subr.mxu0 0.0
    %1629 = vmatpush1.msra.mxu0 0.0
    %1630 = vmatprep.subr.mxu0 0.0
    %1631 = vmatpush1.msra.mxu0 0.0
    %1632 = vmatprep.subr.mxu0 0.0
    %1633 = vmatpush1.msra.mxu0 0.0
    %1634 = vmatprep.subr.mxu0 0.0
    %1635 = vmatpush1.msra.mxu0 0.0
    %1636 = vmatprep.subr.mxu0 0.0
    %1637 = vmatpush1.msra.mxu0 0.0
    %1638 = vmatprep.subr.mxu0 0.0
    %v1639 = vand.u32 %v1615, 4294901760
    %1640 = vmatpush1.msra.mxu0 %v1639
    %1641 = vmatprep.subr.mxu0 0.0
    %v1642 = vand.u32 %v1614, 4294901760
    %1643 = vmatpush1.msra.mxu0 %v1642
    %1644 = vmatprep.subr.mxu0 0.0
    %v1645 = vand.u32 %v1613, 4294901760
    %1646 = vmatpush1.msra.mxu0 %v1645
    %1647 = vmatprep.subr.mxu0 0.0
    %v1648 = vand.u32 %v1612, 4294901760
    %1649 = vmatpush1.msra.mxu0 %v1648
    %1650 = vmatprep.subr.mxu0 0.0
    %v1651 = vand.u32 %v1611, 4294901760
    %1652 = vmatpush1.msra.mxu0 %v1651
    %1653 = vmatprep.subr.mxu0 0.0
    %v1654 = vand.u32 %v1610, 4294901760
    %1655 = vmatpush1.msra.mxu0 %v1654
    %1656 = vmatprep.subr.mxu0 0.0
    %v1657 = vand.u32 %v1609, 4294901760
    %1658 = vmatpush1.msra.mxu0 %v1657
    %1659 = vmatprep.subr.mxu0 0.0
    %v1660 = vand.u32 %v1608, 4294901760
    %1661 = vmatpush1.msra.mxu0 %v1660
    %1662 = vmatprep.subr.mxu0 0.0
    %1663 = vmatpush2.msra.mxu0 0.0
    %1664 = vmatprep.subr.mxu0 0.0
    %1665 = vmatpush2.msra.mxu0 0.0
    %1666 = vmatprep.subr.mxu0 0.0
    %1667 = vmatpush2.msra.mxu0 0.0
    %1668 = vmatprep.subr.mxu0 0.0
    %1669 = vmatpush2.msra.mxu0 0.0
    %1670 = vmatprep.subr.mxu0 0.0
    %1671 = vmatpush2.msra.mxu0 0.0
    %1672 = vmatprep.subr.mxu0 0.0
    %1673 = vmatpush2.msra.mxu0 0.0
    %1674 = vmatprep.subr.mxu0 0.0
    %1675 = vmatpush2.msra.mxu0 0.0
    %1676 = vmatprep.subr.mxu0 0.0
    %1677 = vmatpush2.msra.mxu0 0.0
    %1678 = vmatprep.subr.mxu0 0.0
    %1679 = vmatpush2.msra.mxu0 0.0
    %1680 = vmatprep.subr.mxu0 0.0
    %1681 = vmatpush2.msra.mxu0 0.0
    %1682 = vmatprep.subr.mxu0 0.0
    %1683 = vmatpush2.msra.mxu0 0.0
    %1684 = vmatprep.subr.mxu0 0.0
    %1685 = vmatpush2.msra.mxu0 0.0
    %1686 = vmatprep.subr.mxu0 0.0
    %1687 = vmatpush2.msra.mxu0 0.0
    %1688 = vmatprep.subr.mxu0 0.0
    %1689 = vmatpush2.msra.mxu0 0.0
    %1690 = vmatprep.subr.mxu0 0.0
    %1691 = vmatpush2.msra.mxu0 0.0
    %1692 = vmatprep.subr.mxu0 0.0
    %1693 = vmatpush2.msra.mxu0 0.0
    %1694 = vmatprep.mubr.f32.mxu0 0.0
    %v1695 = vand.u32 %v1620, 4294901760
    %v1696 = vsub.f32 %v1620, %v1695
    %v1697 = vand.u32 %v1696, 4294901760
    %v1698 = vsub.f32 %v1696, %v1697
    %v1699 = vand.u32 %v1698, 4294901760
    %1700 = vmatmul.mubr.f32.gmra.mxu0 %v1699
    %v1701 = vpop.f32.mrf.mxu0
    %v1702 = vadd.f32 0.0, %v1701
    %v1703 = vpop.f32.mrf.mxu0
    %1704 = vdwg.mxu0
    %1705 = vmatprep.subr.mxu0 0.0
    %1706 = vmatpush1.msra.mxu0 0.0
    %1707 = vmatprep.subr.mxu0 0.0
    %1708 = vmatpush1.msra.mxu0 0.0
    %1709 = vmatprep.subr.mxu0 0.0
    %1710 = vmatpush1.msra.mxu0 0.0
    %1711 = vmatprep.subr.mxu0 0.0
    %1712 = vmatpush1.msra.mxu0 0.0
    %1713 = vmatprep.subr.mxu0 0.0
    %1714 = vmatpush1.msra.mxu0 0.0
    %1715 = vmatprep.subr.mxu0 0.0
    %1716 = vmatpush1.msra.mxu0 0.0
    %1717 = vmatprep.subr.mxu0 0.0
    %1718 = vmatpush1.msra.mxu0 0.0
    %1719 = vmatprep.subr.mxu0 0.0
    %1720 = vmatpush1.msra.mxu0 0.0
    %1721 = vmatprep.subr.mxu0 0.0
    %v1722 = vand.u32 %v1615, 4294901760
    %v1723 = vsub.f32 %v1615, %v1722
    %v1724 = vand.u32 %v1723, 4294901760
    %v1725 = vsub.f32 %v1723, %v1724
    %v1726 = vand.u32 %v1725, 4294901760
    %1727 = vmatpush1.msra.mxu0 %v1726
    %1728 = vmatprep.subr.mxu0 0.0
    %v1729 = vand.u32 %v1614, 4294901760
    %v1730 = vsub.f32 %v1614, %v1729
    %v1731 = vand.u32 %v1730, 4294901760
    %v1732 = vsub.f32 %v1730, %v1731
    %v1733 = vand.u32 %v1732, 4294901760
    %1734 = vmatpush1.msra.mxu0 %v1733
    %1735 = vmatprep.subr.mxu0 0.0
    %v1736 = vand.u32 %v1613, 4294901760
    %v1737 = vsub.f32 %v1613, %v1736
    %v1738 = vand.u32 %v1737, 4294901760
    %v1739 = vsub.f32 %v1737, %v1738
    %v1740 = vand.u32 %v1739, 4294901760
    %1741 = vmatpush1.msra.mxu0 %v1740
    %1742 = vmatprep.subr.mxu0 0.0
    %v1743 = vand.u32 %v1612, 4294901760
    %v1744 = vsub.f32 %v1612, %v1743
    %v1745 = vand.u32 %v1744, 4294901760
    %v1746 = vsub.f32 %v1744, %v1745
    %v1747 = vand.u32 %v1746, 4294901760
    %1748 = vmatpush1.msra.mxu0 %v1747
    %1749 = vmatprep.subr.mxu0 0.0
    %v1750 = vand.u32 %v1611, 4294901760
    %v1751 = vsub.f32 %v1611, %v1750
    %v1752 = vand.u32 %v1751, 4294901760
    %v1753 = vsub.f32 %v1751, %v1752
    %v1754 = vand.u32 %v1753, 4294901760
    %1755 = vmatpush1.msra.mxu0 %v1754
    %1756 = vmatprep.subr.mxu0 0.0
    %v1757 = vand.u32 %v1610, 4294901760
    %v1758 = vsub.f32 %v1610, %v1757
    %v1759 = vand.u32 %v1758, 4294901760
    %v1760 = vsub.f32 %v1758, %v1759
    %v1761 = vand.u32 %v1760, 4294901760
    %1762 = vmatpush1.msra.mxu0 %v1761
    %1763 = vmatprep.subr.mxu0 0.0
    %v1764 = vand.u32 %v1609, 4294901760
    %v1765 = vsub.f32 %v1609, %v1764
    %v1766 = vand.u32 %v1765, 4294901760
    %v1767 = vsub.f32 %v1765, %v1766
    %v1768 = vand.u32 %v1767, 4294901760
    %1769 = vmatpush1.msra.mxu0 %v1768
    %1770 = vmatprep.subr.mxu0 0.0
    %v1771 = vand.u32 %v1608, 4294901760
    %v1772 = vsub.f32 %v1608, %v1771
    %v1773 = vand.u32 %v1772, 4294901760
    %v1774 = vsub.f32 %v1772, %v1773
    %v1775 = vand.u32 %v1774, 4294901760
    %1776 = vmatpush1.msra.mxu0 %v1775
    %1777 = vmatprep.subr.mxu0 0.0
    %1778 = vmatpush2.msra.mxu0 0.0
    %1779 = vmatprep.subr.mxu0 0.0
    %1780 = vmatpush2.msra.mxu0 0.0
    %1781 = vmatprep.subr.mxu0 0.0
    %1782 = vmatpush2.msra.mxu0 0.0
    %1783 = vmatprep.subr.mxu0 0.0
    %1784 = vmatpush2.msra.mxu0 0.0
    %1785 = vmatprep.subr.mxu0 0.0
    %1786 = vmatpush2.msra.mxu0 0.0
    %1787 = vmatprep.subr.mxu0 0.0
    %1788 = vmatpush2.msra.mxu0 0.0
    %1789 = vmatprep.subr.mxu0 0.0
    %1790 = vmatpush2.msra.mxu0 0.0
    %1791 = vmatprep.subr.mxu0 0.0
    %1792 = vmatpush2.msra.mxu0 0.0
    %1793 = vmatprep.subr.mxu0 0.0
    %1794 = vmatpush2.msra.mxu0 0.0
    %1795 = vmatprep.subr.mxu0 0.0
    %1796 = vmatpush2.msra.mxu0 0.0
    %1797 = vmatprep.subr.mxu0 0.0
    %1798 = vmatpush2.msra.mxu0 0.0
    %1799 = vmatprep.subr.mxu0 0.0
    %1800 = vmatpush2.msra.mxu0 0.0
    %1801 = vmatprep.subr.mxu0 0.0
    %1802 = vmatpush2.msra.mxu0 0.0
    %1803 = vmatprep.subr.mxu0 0.0
    %1804 = vmatpush2.msra.mxu0 0.0
    %1805 = vmatprep.subr.mxu0 0.0
    %1806 = vmatpush2.msra.mxu0 0.0
    %1807 = vmatprep.subr.mxu0 0.0
    %1808 = vmatpush2.msra.mxu0 0.0
    %1809 = vmatprep.mubr.f32.mxu0 0.0
    %v1810 = vand.u32 %v1620, 4294901760
    %1811 = vmatmul.mubr.f32.gmra.mxu0 %v1810
    %v1812 = vpop.f32.mrf.mxu0
    %v1813 = vadd.f32 %v1702, %v1812
    %v1814 = vpop.f32.mrf.mxu0
    %1815 = vdwg.mxu0
    %1816 = vmatprep.subr.mxu0 0.0
    %1817 = vmatpush1.msra.mxu0 0.0
    %1818 = vmatprep.subr.mxu0 0.0
    %1819 = vmatpush1.msra.mxu0 0.0
    %1820 = vmatprep.subr.mxu0 0.0
    %1821 = vmatpush1.msra.mxu0 0.0
    %1822 = vmatprep.subr.mxu0 0.0
    %1823 = vmatpush1.msra.mxu0 0.0
    %1824 = vmatprep.subr.mxu0 0.0
    %1825 = vmatpush1.msra.mxu0 0.0
    %1826 = vmatprep.subr.mxu0 0.0
    %1827 = vmatpush1.msra.mxu0 0.0
    %1828 = vmatprep.subr.mxu0 0.0
    %1829 = vmatpush1.msra.mxu0 0.0
    %1830 = vmatprep.subr.mxu0 0.0
    %1831 = vmatpush1.msra.mxu0 0.0
    %1832 = vmatprep.subr.mxu0 0.0
    %v1833 = vand.u32 %v1615, 4294901760
    %v1834 = vsub.f32 %v1615, %v1833
    %1835 = vmatpush1.msra.mxu0 %v1834
    %1836 = vmatprep.subr.mxu0 0.0
    %v1837 = vand.u32 %v1614, 4294901760
    %v1838 = vsub.f32 %v1614, %v1837
    %1839 = vmatpush1.msra.mxu0 %v1838
    %1840 = vmatprep.subr.mxu0 0.0
    %v1841 = vand.u32 %v1613, 4294901760
    %v1842 = vsub.f32 %v1613, %v1841
    %1843 = vmatpush1.msra.mxu0 %v1842
    %1844 = vmatprep.subr.mxu0 0.0
    %v1845 = vand.u32 %v1612, 4294901760
    %v1846 = vsub.f32 %v1612, %v1845
    %1847 = vmatpush1.msra.mxu0 %v1846
    %1848 = vmatprep.subr.mxu0 0.0
    %v1849 = vand.u32 %v1611, 4294901760
    %v1850 = vsub.f32 %v1611, %v1849
    %1851 = vmatpush1.msra.mxu0 %v1850
    %1852 = vmatprep.subr.mxu0 0.0
    %v1853 = vand.u32 %v1610, 4294901760
    %v1854 = vsub.f32 %v1610, %v1853
    %1855 = vmatpush1.msra.mxu0 %v1854
    %1856 = vmatprep.subr.mxu0 0.0
    %v1857 = vand.u32 %v1609, 4294901760
    %v1858 = vsub.f32 %v1609, %v1857
    %1859 = vmatpush1.msra.mxu0 %v1858
    %1860 = vmatprep.subr.mxu0 0.0
    %v1861 = vand.u32 %v1608, 4294901760
    %v1862 = vsub.f32 %v1608, %v1861
    %1863 = vmatpush1.msra.mxu0 %v1862
    %1864 = vmatprep.subr.mxu0 0.0
    %1865 = vmatpush2.msra.mxu0 0.0
    %1866 = vmatprep.subr.mxu0 0.0
    %1867 = vmatpush2.msra.mxu0 0.0
    %1868 = vmatprep.subr.mxu0 0.0
    %1869 = vmatpush2.msra.mxu0 0.0
    %1870 = vmatprep.subr.mxu0 0.0
    %1871 = vmatpush2.msra.mxu0 0.0
    %1872 = vmatprep.subr.mxu0 0.0
    %1873 = vmatpush2.msra.mxu0 0.0
    %1874 = vmatprep.subr.mxu0 0.0
    %1875 = vmatpush2.msra.mxu0 0.0
    %1876 = vmatprep.subr.mxu0 0.0
    %1877 = vmatpush2.msra.mxu0 0.0
    %1878 = vmatprep.subr.mxu0 0.0
    %1879 = vmatpush2.msra.mxu0 0.0
    %1880 = vmatprep.subr.mxu0 0.0
    %1881 = vmatpush2.msra.mxu0 0.0
    %1882 = vmatprep.subr.mxu0 0.0
    %1883 = vmatpush2.msra.mxu0 0.0
    %1884 = vmatprep.subr.mxu0 0.0
    %1885 = vmatpush2.msra.mxu0 0.0
    %1886 = vmatprep.subr.mxu0 0.0
    %1887 = vmatpush2.msra.mxu0 0.0
    %1888 = vmatprep.subr.mxu0 0.0
    %1889 = vmatpush2.msra.mxu0 0.0
    %1890 = vmatprep.subr.mxu0 0.0
    %1891 = vmatpush2.msra.mxu0 0.0
    %1892 = vmatprep.subr.mxu0 0.0
    %1893 = vmatpush2.msra.mxu0 0.0
    %1894 = vmatprep.subr.mxu0 0.0
    %1895 = vmatpush2.msra.mxu0 0.0
    %1896 = vmatprep.mubr.f32.mxu0 0.0
    %v1897 = vand.u32 %v1620, 4294901760
    %v1898 = vsub.f32 %v1620, %v1897
    %1899 = vmatmul.mubr.f32.gmra.mxu0 %v1898
    %v1900 = vpop.f32.mrf.mxu0
    %v1901 = vadd.f32 %v1813, %v1900
    %v1902 = vpop.f32.mrf.mxu0
    %1903 = vdwg.mxu0
    %1904 = vmatprep.subr.mxu0 0.0
    %1905 = vmatpush1.msra.mxu0 0.0
    %1906 = vmatprep.subr.mxu0 0.0
    %1907 = vmatpush1.msra.mxu0 0.0
    %1908 = vmatprep.subr.mxu0 0.0
    %1909 = vmatpush1.msra.mxu0 0.0
    %1910 = vmatprep.subr.mxu0 0.0
    %1911 = vmatpush1.msra.mxu0 0.0
    %1912 = vmatprep.subr.mxu0 0.0
    %1913 = vmatpush1.msra.mxu0 0.0
    %1914 = vmatprep.subr.mxu0 0.0
    %1915 = vmatpush1.msra.mxu0 0.0
    %1916 = vmatprep.subr.mxu0 0.0
    %1917 = vmatpush1.msra.mxu0 0.0
    %1918 = vmatprep.subr.mxu0 0.0
    %1919 = vmatpush1.msra.mxu0 0.0
    %1920 = vmatprep.subr.mxu0 0.0
    %v1921 = vand.u32 %v1615, 4294901760
    %1922 = vmatpush1.msra.mxu0 %v1921
    %1923 = vmatprep.subr.mxu0 0.0
    %v1924 = vand.u32 %v1614, 4294901760
    %1925 = vmatpush1.msra.mxu0 %v1924
    %1926 = vmatprep.subr.mxu0 0.0
    %v1927 = vand.u32 %v1613, 4294901760
    %1928 = vmatpush1.msra.mxu0 %v1927
    %1929 = vmatprep.subr.mxu0 0.0
    %v1930 = vand.u32 %v1612, 4294901760
    %1931 = vmatpush1.msra.mxu0 %v1930
    %1932 = vmatprep.subr.mxu0 0.0
    %v1933 = vand.u32 %v1611, 4294901760
    %1934 = vmatpush1.msra.mxu0 %v1933
    %1935 = vmatprep.subr.mxu0 0.0
    %v1936 = vand.u32 %v1610, 4294901760
    %1937 = vmatpush1.msra.mxu0 %v1936
    %1938 = vmatprep.subr.mxu0 0.0
    %v1939 = vand.u32 %v1609, 4294901760
    %1940 = vmatpush1.msra.mxu0 %v1939
    %1941 = vmatprep.subr.mxu0 0.0
    %v1942 = vand.u32 %v1608, 4294901760
    %1943 = vmatpush1.msra.mxu0 %v1942
    %1944 = vmatprep.subr.mxu0 0.0
    %1945 = vmatpush2.msra.mxu0 0.0
    %1946 = vmatprep.subr.mxu0 0.0
    %1947 = vmatpush2.msra.mxu0 0.0
    %1948 = vmatprep.subr.mxu0 0.0
    %1949 = vmatpush2.msra.mxu0 0.0
    %1950 = vmatprep.subr.mxu0 0.0
    %1951 = vmatpush2.msra.mxu0 0.0
    %1952 = vmatprep.subr.mxu0 0.0
    %1953 = vmatpush2.msra.mxu0 0.0
    %1954 = vmatprep.subr.mxu0 0.0
    %1955 = vmatpush2.msra.mxu0 0.0
    %1956 = vmatprep.subr.mxu0 0.0
    %1957 = vmatpush2.msra.mxu0 0.0
    %1958 = vmatprep.subr.mxu0 0.0
    %1959 = vmatpush2.msra.mxu0 0.0
    %1960 = vmatprep.subr.mxu0 0.0
    %1961 = vmatpush2.msra.mxu0 0.0
    %1962 = vmatprep.subr.mxu0 0.0
    %1963 = vmatpush2.msra.mxu0 0.0
    %1964 = vmatprep.subr.mxu0 0.0
    %1965 = vmatpush2.msra.mxu0 0.0
    %1966 = vmatprep.subr.mxu0 0.0
    %1967 = vmatpush2.msra.mxu0 0.0
    %1968 = vmatprep.subr.mxu0 0.0
    %1969 = vmatpush2.msra.mxu0 0.0
    %1970 = vmatprep.subr.mxu0 0.0
    %1971 = vmatpush2.msra.mxu0 0.0
    %1972 = vmatprep.subr.mxu0 0.0
    %1973 = vmatpush2.msra.mxu0 0.0
    %1974 = vmatprep.subr.mxu0 0.0
    %1975 = vmatpush2.msra.mxu0 0.0
    %1976 = vmatprep.mubr.f32.mxu0 0.0
    %v1977 = vand.u32 %v1620, 4294901760
    %v1978 = vsub.f32 %v1620, %v1977
    %v1979 = vand.u32 %v1978, 4294901760
    %1980 = vmatmul.mubr.f32.gmra.mxu0 %v1979
    %v1981 = vpop.f32.mrf.mxu0
    %v1982 = vadd.f32 %v1901, %v1981
    %v1983 = vpop.f32.mrf.mxu0
    %1984 = vdwg.mxu0
    %1985 = vmatprep.subr.mxu0 0.0
    %1986 = vmatpush1.msra.mxu0 0.0
    %1987 = vmatprep.subr.mxu0 0.0
    %1988 = vmatpush1.msra.mxu0 0.0
    %1989 = vmatprep.subr.mxu0 0.0
    %1990 = vmatpush1.msra.mxu0 0.0
    %1991 = vmatprep.subr.mxu0 0.0
    %1992 = vmatpush1.msra.mxu0 0.0
    %1993 = vmatprep.subr.mxu0 0.0
    %1994 = vmatpush1.msra.mxu0 0.0
    %1995 = vmatprep.subr.mxu0 0.0
    %1996 = vmatpush1.msra.mxu0 0.0
    %1997 = vmatprep.subr.mxu0 0.0
    %1998 = vmatpush1.msra.mxu0 0.0
    %1999 = vmatprep.subr.mxu0 0.0
    %2000 = vmatpush1.msra.mxu0 0.0
    %2001 = vmatprep.subr.mxu0 0.0
    %v2002 = vand.u32 %v1615, 4294901760
    %v2003 = vsub.f32 %v1615, %v2002
    %v2004 = vand.u32 %v2003, 4294901760
    %2005 = vmatpush1.msra.mxu0 %v2004
    %2006 = vmatprep.subr.mxu0 0.0
    %v2007 = vand.u32 %v1614, 4294901760
    %v2008 = vsub.f32 %v1614, %v2007
    %v2009 = vand.u32 %v2008, 4294901760
    %2010 = vmatpush1.msra.mxu0 %v2009
    %2011 = vmatprep.subr.mxu0 0.0
    %v2012 = vand.u32 %v1613, 4294901760
    %v2013 = vsub.f32 %v1613, %v2012
    %v2014 = vand.u32 %v2013, 4294901760
    %2015 = vmatpush1.msra.mxu0 %v2014
    %2016 = vmatprep.subr.mxu0 0.0
    %v2017 = vand.u32 %v1612, 4294901760
    %v2018 = vsub.f32 %v1612, %v2017
    %v2019 = vand.u32 %v2018, 4294901760
    %2020 = vmatpush1.msra.mxu0 %v2019
    %2021 = vmatprep.subr.mxu0 0.0
    %v2022 = vand.u32 %v1611, 4294901760
    %v2023 = vsub.f32 %v1611, %v2022
    %v2024 = vand.u32 %v2023, 4294901760
    %2025 = vmatpush1.msra.mxu0 %v2024
    %2026 = vmatprep.subr.mxu0 0.0
    %v2027 = vand.u32 %v1610, 4294901760
    %v2028 = vsub.f32 %v1610, %v2027
    %v2029 = vand.u32 %v2028, 4294901760
    %2030 = vmatpush1.msra.mxu0 %v2029
    %2031 = vmatprep.subr.mxu0 0.0
    %v2032 = vand.u32 %v1609, 4294901760
    %v2033 = vsub.f32 %v1609, %v2032
    %v2034 = vand.u32 %v2033, 4294901760
    %2035 = vmatpush1.msra.mxu0 %v2034
    %2036 = vmatprep.subr.mxu0 0.0
    %v2037 = vand.u32 %v1608, 4294901760
    %v2038 = vsub.f32 %v1608, %v2037
    %v2039 = vand.u32 %v2038, 4294901760
    %2040 = vmatpush1.msra.mxu0 %v2039
    %2041 = vmatprep.subr.mxu0 0.0
    %2042 = vmatpush2.msra.mxu0 0.0
    %2043 = vmatprep.subr.mxu0 0.0
    %2044 = vmatpush2.msra.mxu0 0.0
    %2045 = vmatprep.subr.mxu0 0.0
    %2046 = vmatpush2.msra.mxu0 0.0
    %2047 = vmatprep.subr.mxu0 0.0
    %2048 = vmatpush2.msra.mxu0 0.0
    %2049 = vmatprep.subr.mxu0 0.0
    %2050 = vmatpush2.msra.mxu0 0.0
    %2051 = vmatprep.subr.mxu0 0.0
    %2052 = vmatpush2.msra.mxu0 0.0
    %2053 = vmatprep.subr.mxu0 0.0
    %2054 = vmatpush2.msra.mxu0 0.0
    %2055 = vmatprep.subr.mxu0 0.0
    %2056 = vmatpush2.msra.mxu0 0.0
    %2057 = vmatprep.subr.mxu0 0.0
    %2058 = vmatpush2.msra.mxu0 0.0
    %2059 = vmatprep.subr.mxu0 0.0
    %2060 = vmatpush2.msra.mxu0 0.0
    %2061 = vmatprep.subr.mxu0 0.0
    %2062 = vmatpush2.msra.mxu0 0.0
    %2063 = vmatprep.subr.mxu0 0.0
    %2064 = vmatpush2.msra.mxu0 0.0
    %2065 = vmatprep.subr.mxu0 0.0
    %2066 = vmatpush2.msra.mxu0 0.0
    %2067 = vmatprep.subr.mxu0 0.0
    %2068 = vmatpush2.msra.mxu0 0.0
    %2069 = vmatprep.subr.mxu0 0.0
    %2070 = vmatpush2.msra.mxu0 0.0
    %2071 = vmatprep.subr.mxu0 0.0
    %2072 = vmatpush2.msra.mxu0 0.0
    %2073 = vmatprep.mubr.f32.mxu0 0.0
    %v2074 = vand.u32 %v1620, 4294901760
    %2075 = vmatmul.mubr.f32.gmra.mxu0 %v2074
    %v2076 = vpop.f32.mrf.mxu0
    %v2077 = vadd.f32 %v1982, %v2076
    %v2078 = vpop.f32.mrf.mxu0
    %2079 = vdwg.mxu0
    %2080 = vmatprep.subr.mxu0 0.0
    %2081 = vmatpush1.msra.mxu0 0.0
    %2082 = vmatprep.subr.mxu0 0.0
    %2083 = vmatpush1.msra.mxu0 0.0
    %2084 = vmatprep.subr.mxu0 0.0
    %2085 = vmatpush1.msra.mxu0 0.0
    %2086 = vmatprep.subr.mxu0 0.0
    %2087 = vmatpush1.msra.mxu0 0.0
    %2088 = vmatprep.subr.mxu0 0.0
    %2089 = vmatpush1.msra.mxu0 0.0
    %2090 = vmatprep.subr.mxu0 0.0
    %2091 = vmatpush1.msra.mxu0 0.0
    %2092 = vmatprep.subr.mxu0 0.0
    %2093 = vmatpush1.msra.mxu0 0.0
    %2094 = vmatprep.subr.mxu0 0.0
    %2095 = vmatpush1.msra.mxu0 0.0
    %2096 = vmatprep.subr.mxu0 0.0
    %v2097 = vand.u32 %v1615, 4294901760
    %2098 = vmatpush1.msra.mxu0 %v2097
    %2099 = vmatprep.subr.mxu0 0.0
    %v2100 = vand.u32 %v1614, 4294901760
    %2101 = vmatpush1.msra.mxu0 %v2100
    %2102 = vmatprep.subr.mxu0 0.0
    %v2103 = vand.u32 %v1613, 4294901760
    %2104 = vmatpush1.msra.mxu0 %v2103
    %2105 = vmatprep.subr.mxu0 0.0
    %v2106 = vand.u32 %v1612, 4294901760
    %2107 = vmatpush1.msra.mxu0 %v2106
    %2108 = vmatprep.subr.mxu0 0.0
    %v2109 = vand.u32 %v1611, 4294901760
    %2110 = vmatpush1.msra.mxu0 %v2109
    %2111 = vmatprep.subr.mxu0 0.0
    %v2112 = vand.u32 %v1610, 4294901760
    %2113 = vmatpush1.msra.mxu0 %v2112
    %2114 = vmatprep.subr.mxu0 0.0
    %v2115 = vand.u32 %v1609, 4294901760
    %2116 = vmatpush1.msra.mxu0 %v2115
    %2117 = vmatprep.subr.mxu0 0.0
    %v2118 = vand.u32 %v1608, 4294901760
    %2119 = vmatpush1.msra.mxu0 %v2118
    %2120 = vmatprep.subr.mxu0 0.0
    %2121 = vmatpush2.msra.mxu0 0.0
    %2122 = vmatprep.subr.mxu0 0.0
    %2123 = vmatpush2.msra.mxu0 0.0
    %2124 = vmatprep.subr.mxu0 0.0
    %2125 = vmatpush2.msra.mxu0 0.0
    %2126 = vmatprep.subr.mxu0 0.0
    %2127 = vmatpush2.msra.mxu0 0.0
    %2128 = vmatprep.subr.mxu0 0.0
    %2129 = vmatpush2.msra.mxu0 0.0
    %2130 = vmatprep.subr.mxu0 0.0
    %2131 = vmatpush2.msra.mxu0 0.0
    %2132 = vmatprep.subr.mxu0 0.0
    %2133 = vmatpush2.msra.mxu0 0.0
    %2134 = vmatprep.subr.mxu0 0.0
    %2135 = vmatpush2.msra.mxu0 0.0
    %2136 = vmatprep.subr.mxu0 0.0
    %2137 = vmatpush2.msra.mxu0 0.0
    %2138 = vmatprep.subr.mxu0 0.0
    %2139 = vmatpush2.msra.mxu0 0.0
    %2140 = vmatprep.subr.mxu0 0.0
    %2141 = vmatpush2.msra.mxu0 0.0
    %2142 = vmatprep.subr.mxu0 0.0
    %2143 = vmatpush2.msra.mxu0 0.0
    %2144 = vmatprep.subr.mxu0 0.0
    %2145 = vmatpush2.msra.mxu0 0.0
    %2146 = vmatprep.subr.mxu0 0.0
    %2147 = vmatpush2.msra.mxu0 0.0
    %2148 = vmatprep.subr.mxu0 0.0
    %2149 = vmatpush2.msra.mxu0 0.0
    %2150 = vmatprep.subr.mxu0 0.0
    %2151 = vmatpush2.msra.mxu0 0.0
    %2152 = vmatprep.mubr.f32.mxu0 0.0
    %v2153 = vand.u32 %v1620, 4294901760
    %2154 = vmatmul.mubr.f32.gmra.mxu0 %v2153
    %v2155 = vpop.f32.mrf.mxu0
    %v2156 = vadd.f32 %v2077, %v2155
    %v2157 = vpop.f32.mrf.mxu0
    %2158 = vdwg.mxu0
    %s2159 = sld [smem:[#allocation3]]
    %v2160 = vstv %s2159
    %v2161 = vadd.f32 %v2156, %v2160
    %2162 = vst [vmem:[#allocation4] sm:$0x1] %v2161
    // Predicated region
    $region22: #{tpu_custom_call.1} parent=1 // pred_check
      _
    $region23: #{tpu_custom_call.1} parent=1 // pred_check_branch
      %2164 = sbr.rel (0) target = $region25
    $region24: #{tpu_custom_call.1} parent=1 // pred_region
      %s2166 = ssub.s32 16, 16
      %2167 = vsyncadd [#allocation5], %s2166
      %s2169 = sshll.u32 [#allocation4], 4
      %s2170 = int_to_ptr.vmem [resolvable:$true] %s2169
      %2172 = dma.vmem_to_hbm [thread:$0]  %s2170, 16, %s5, [#allocation5]
    $region25: #{tpu_custom_call.1} parent=1 // pred_fallthru
      _
    // Predicated region
    $region26: #{tpu_custom_call.1} parent=1 // pred_check
      _
    $region27: #{tpu_custom_call.1} parent=1 // pred_check_branch
      %2174 = sbr.rel (0) target = $region29
    $region28: #{tpu_custom_call.1} parent=1 // pred_region
      %2175 = dma.done [#allocation5], 16
    $region29: #{tpu_custom_call.1} parent=1 // pred_fallthru
      _
    %2176 = vsyncpa [#allocation5], 1

</llo_original>
